<compile_context>
chip_gen: v7x
topology: tpu7x:2x2x1
jax: 0.10.0
libtpu: 0.0.40
codegen_flags: <defaults>
</compile_context>

<pallas_src>
import jax
import jax.numpy as jnp
from jax.experimental import pallas as pl
from jax.experimental.pallas import tpu as pltpu


# ----------------------------------------------------------------------------
# Parameter helpers
# ----------------------------------------------------------------------------
def _fold_bn(gamma, beta, mean, var, eps=1e-5):
    scale = gamma / jnp.sqrt(var + eps)
    bias = beta - mean * scale
    return scale, bias


def _fold_params(params, expand, hidden, oup):
    """Fold BN scales into the conv weights; cast MXU weights to bf16."""
    f = {
        "w_dw": (params["w_dw"] * params["dw_s"].reshape(1, 1, hidden)).astype(jnp.float32),
        "dw_b": params["dw_b"].astype(jnp.float32),
        "w_pr": (params["w_proj"] * params["pr_s"].reshape(1, oup)).astype(jnp.bfloat16),
        "pr_b": params["pr_b"].astype(jnp.float32),
    }
    if expand:
        f["w_ex"] = (params["w_exp"] * params["exp_s"].reshape(1, hidden)).astype(jnp.bfloat16)
        f["exp_b"] = params["exp_b"].astype(jnp.float32)
    return f


def init_params(key, inp, oup, expand_ratio):
    """Deterministic synthetic parameters (conv weights + folded BatchNorm)."""
    hidden = int(round(inp * expand_ratio))
    keys = jax.random.split(key, 6)

    def bn(k, c):
        k1, k2, k3, k4 = jax.random.split(k, 4)
        gamma = jax.random.uniform(k1, (c,), minval=0.5, maxval=1.5)
        beta = 0.1 * jax.random.normal(k2, (c,))
        mean = 0.1 * jax.random.normal(k3, (c,))
        var = jax.random.uniform(k4, (c,), minval=0.5, maxval=1.5)
        s, b = _fold_bn(gamma, beta, mean, var)
        return (s.reshape(1, c).astype(jnp.float32),
                b.reshape(1, c).astype(jnp.float32))

    p = {}
    if expand_ratio != 1:
        p["w_exp"] = 0.3 * jax.random.normal(keys[0], (inp, hidden), jnp.float32)
        p["exp_s"], p["exp_b"] = bn(keys[1], hidden)
    p["w_dw"] = 0.3 * jax.random.normal(keys[2], (3, 3, hidden), jnp.float32)
    p["dw_s"], p["dw_b"] = bn(keys[3], hidden)
    p["w_proj"] = 0.3 * jax.random.normal(keys[4], (hidden, oup), jnp.float32)
    p["pr_s"], p["pr_b"] = bn(keys[5], oup)
    return p


# ----------------------------------------------------------------------------
# Kernel
# ----------------------------------------------------------------------------
def _make_kernel(*, stride, expand, use_res, THo, Wo, Wpad, rows_in, Cin, hidden, oup):
    def depthwise(h, w_dw_ref):
        acc = jnp.zeros((THo, Wo, hidden), jnp.float32)
        if stride == 1:
            for di in range(3):
                for dj in range(3):
                    tap = h[di:di + THo, dj:dj + Wo, :]
                    acc = acc + tap * w_dw_ref[di, dj, :]
        else:
            # 4-phase parity decomposition, computed once (rows_in and Wpad are even).
            hr = h.reshape(rows_in // 2, 2, Wpad, hidden)
            he, ho = hr[:, 0], hr[:, 1]                      # even / odd rows

            def split_cols(p):
                p4 = p.reshape(p.shape[0], Wpad // 2, 2, hidden)
                return p4[:, :, 0, :], p4[:, :, 1, :]        # even / odd cols

            phases = (split_cols(he), split_cols(ho))        # phases[row%2][col%2]
            for di in range(3):
                for dj in range(3):
                    ph = phases[di % 2][dj % 2]
                    tap = ph[di // 2:di // 2 + THo, dj // 2:dj // 2 + Wo, :]
                    acc = acc + tap * w_dw_ref[di, dj, :]
        return acc

    def kernel(*refs):
        if expand:
            (x_ref, mask_ref, w_exp_ref, exp_b_ref,
             w_dw_ref, dw_b_ref, w_pr_ref, pr_b_ref, out_ref) = refs
        else:
            (x_ref, w_dw_ref, dw_b_ref, w_pr_ref, pr_b_ref, out_ref) = refs

        x = x_ref[0, 0]                                      # (rows_in, Wpad, Cin) f32

        # ---- expand 1x1 conv (bf16 MXU) + BN bias + ReLU6, re-zero padding ----
        if expand:
            xm = x.reshape(rows_in * Wpad, Cin).astype(jnp.bfloat16)
            h = jnp.dot(xm, w_exp_ref[...], preferred_element_type=jnp.float32)
            h = jnp.clip(h + exp_b_ref[...], 0.0, 6.0)
            h = h.reshape(rows_in, Wpad, hidden) * mask_ref[0]
        else:
            h = x                                            # hidden == Cin

        # ---- depthwise 3x3 conv + BN bias + ReLU6 ----
        acc = depthwise(h, w_dw_ref)
        h2 = jnp.clip(acc + dw_b_ref[...], 0.0, 6.0)

        # ---- project 1x1 conv (bf16 MXU) + BN bias ----
        ym = h2.reshape(THo * Wo, hidden).astype(jnp.bfloat16)
        y = jnp.dot(ym, w_pr_ref[...], preferred_element_type=jnp.float32)
        y = (y + pr_b_ref[...]).reshape(THo, Wo, oup)

        if use_res:
            y = y + x[1:1 + THo, 1:1 + Wo, :]

        out_ref[0, 0] = y

    return kernel


# ----------------------------------------------------------------------------
# Wrappers
# ----------------------------------------------------------------------------
def _full_spec(shape):
    n = len(shape)
    return pl.BlockSpec(shape, lambda b, i, _n=n: (0,) * _n)


def _pick_row_tile(Ho, Wpad, cin, hidden, oup, stride, budget_bytes=24 * 1024 * 1024):
    """Largest divisor of Ho whose per-step working set fits the VMEM budget."""
    best = 1
    for th in range(1, Ho + 1):
        if Ho % th:
            continue
        rows_in = th * stride + 2
        slab = rows_in * Wpad * cin * 4
        work = rows_in * Wpad * hidden * 4 * 3        # expanded tensor + tap temporaries
        out = th * Wpad * oup * 4
        if 2 * (slab + out) + work <= budget_bytes:   # ~x2 for double buffering
            best = th
    return best


def inverted_residual_nhwc(x_nhwc, params, *, inp, oup, stride, expand_ratio, row_tile=None):
    """Pallas TPU InvertedResidual forward; input/output are NHWC."""
    assert stride in (1, 2)
    B, H, W, Cin = x_nhwc.shape
    assert Cin == inp
    hidden = int(round(inp * expand_ratio))
    expand = expand_ratio != 1
    use_res = (stride == 1) and (inp == oup)
    if stride == 2:
        assert H % 2 == 0 and W % 2 == 0, "stride-2 path assumes even H, W"
    Ho = (H + 2 - 3) // stride + 1
    Wo = (W + 2 - 3) // stride + 1
    Wpad = ((W + 2 + 7) // 8) * 8                      # pad W+2 up to a multiple of 8

    THo = row_tile if row_tile is not None else _pick_row_tile(Ho, Wpad, Cin, hidden, oup, stride)
    assert Ho % THo == 0, "row_tile must divide the output height"
    nH = Ho // THo
    rows_in = THo * stride + 2                         # input rows (with halo) per tile

    x = x_nhwc.astype(jnp.float32)
    xp = jnp.pad(x, ((0, 0), (1, 1), (1, Wpad - W - 1), (0, 0)))
    # Overlapping row slabs with the 1-row halo materialized wrapper-side.
    row_idx = (jnp.arange(nH) * (THo * stride))[:, None] + jnp.arange(rows_in)[None, :]
    slabs = xp[:, row_idx]                             # (B, nH, rows_in, Wpad, Cin)

    f = _fold_params(params, expand, hidden, oup)

    in_arrays = [slabs]
    in_specs = [pl.BlockSpec((1, 1, rows_in, Wpad, Cin), lambda b, i: (b, i, 0, 0, 0))]

    if expand:
        # 0/1 mask that re-zeroes spatial-padding positions after the expand ReLU6.
        row_ok = (row_idx > 0) & (row_idx < H + 1)                    # (nH, rows_in)
        col_ok = (jnp.arange(Wpad) > 0) & (jnp.arange(Wpad) < W + 1)  # (Wpad,)
        mask = (row_ok[:, :, None] & col_ok[None, None, :]).astype(jnp.float32)[..., None]
        in_arrays += [mask, f["w_ex"], f["exp_b"]]
        in_specs += [pl.BlockSpec((1, rows_in, Wpad, 1), lambda b, i: (i, 0, 0, 0)),
                     _full_spec((Cin, hidden)), _full_spec((1, hidden))]

    in_arrays += [f["w_dw"], f["dw_b"], f["w_pr"], f["pr_b"]]
    in_specs += [_full_spec((3, 3, hidden)), _full_spec((1, hidden)),
                 _full_spec((hidden, oup)), _full_spec((1, oup))]

    kernel = _make_kernel(stride=stride, expand=expand, use_res=use_res,
                          THo=THo, Wo=Wo, Wpad=Wpad, rows_in=rows_in,
                          Cin=Cin, hidden=hidden, oup=oup)

    out5 = pl.pallas_call(
        kernel,
        out_shape=jax.ShapeDtypeStruct((B, nH, THo, Wo, oup), jnp.float32),
        grid=(B, nH),
        in_specs=in_specs,
        out_specs=pl.BlockSpec((1, 1, THo, Wo, oup), lambda b, i: (b, i, 0, 0, 0)),
        compiler_params=pltpu.CompilerParams(
            dimension_semantics=("parallel", "parallel"),
            vmem_limit_bytes=64 * 1024 * 1024),
    )(*in_arrays)

    return out5.reshape(B, Ho, Wo, oup)


def inverted_residual_pallas(x_nchw, params, *, inp, oup, stride, expand_ratio, row_tile=None):
    """NCHW-compatible wrapper (PyTorch layout)."""
    x = jnp.transpose(x_nchw, (0, 2, 3, 1))
    y = inverted_residual_nhwc(x, params, inp=inp, oup=oup, stride=stride,
                               expand_ratio=expand_ratio, row_tile=row_tile)
    return jnp.transpose(y, (0, 3, 1, 2))


# ----------------------------------------------------------------------------
# Pure-JAX references
# ----------------------------------------------------------------------------
def _ref_nhwc(x_nhwc, params, *, inp, oup, stride, expand_ratio, mirror_kernel_precision):
    x = x_nhwc.astype(jnp.float32)
    B, H, W, _ = x.shape
    hidden = int(round(inp * expand_ratio))
    expand = expand_ratio != 1
    f = _fold_params(params, expand, hidden, oup) if mirror_kernel_precision else None

    h = x
    if expand:
        a = h.reshape(-1, inp)
        if mirror_kernel_precision:
            h = jnp.dot(a.astype(jnp.bfloat16), f["w_ex"],
                        preferred_element_type=jnp.float32) + f["exp_b"]
        else:
            h = jnp.dot(a, params["w_exp"]) * params["exp_s"] + params["exp_b"]
        h = jnp.clip(h, 0.0, 6.0).reshape(B, H, W, hidden)

    C = h.shape[-1]
    dwk = (f["w_dw"] if mirror_kernel_precision else params["w_dw"]).reshape(3, 3, 1, C)
    h = jax.lax.conv_general_dilated(
        h, dwk, (stride, stride), ((1, 1), (1, 1)),
        dimension_numbers=("NHWC", "HWIO", "NHWC"), feature_group_count=C)

    if mirror_kernel_precision:
        h = jnp.clip(h + f["dw_b"], 0.0, 6.0)
        Ho_, Wo_ = h.shape[1], h.shape[2]
        y = jnp.dot(h.reshape(-1, C).astype(jnp.bfloat16), f["w_pr"],
                    preferred_element_type=jnp.float32) + f["pr_b"]
        y = y.reshape(B, Ho_, Wo_, oup)
    else:
        h = jnp.clip(h * params["dw_s"] + params["dw_b"], 0.0, 6.0)
        y = jnp.einsum("bhwc,cd->bhwd", h, params["w_proj"]) * params["pr_s"] + params["pr_b"]

    if stride == 1 and inp == oup:
        y = y + x
    return y


def inverted_residual_ref(x_nchw, params, *, inp, oup, stride, expand_ratio,
                          mirror_kernel_precision=False):
    x = jnp.transpose(x_nchw, (0, 2, 3, 1))
    y = _ref_nhwc(x, params, inp=inp, oup=oup, stride=stride, expand_ratio=expand_ratio,
                  mirror_kernel_precision=mirror_kernel_precision)
    return jnp.transpose(y, (0, 3, 1, 2))


# ----------------------------------------------------------------------------
# Test
# ----------------------------------------------------------------------------
if __name__ == "__main__":
    key = jax.random.PRNGKey(0)
    configs = [
        # expand + stride 1 + residual, two row tiles
        dict(B=2, inp=4, oup=4, H=16, W=16, stride=1, expand_ratio=6, row_tile=8),
        # no expand + stride 2, auto row tile
        dict(B=2, inp=8, oup=16, H=16, W=16, stride=2, expand_ratio=1, row_tile=None),
        # expand + stride 2, two row tiles
        dict(B=1, inp=4, oup=8, H=16, W=16, stride=2, expand_ratio=6, row_tile=4),
    ]

    for cfg in configs:
        key, kx, kp = jax.random.split(key, 3)
        x = jax.random.normal(kx, (cfg["B"], cfg["inp"], cfg["H"], cfg["W"]), jnp.float32)
        params = init_params(kp, cfg["inp"], cfg["oup"], cfg["expand_ratio"])

        out = inverted_residual_pallas(
            x, params, inp=cfg["inp"], oup=cfg["oup"], stride=cfg["stride"],
            expand_ratio=cfg["expand_ratio"], row_tile=cfg["row_tile"])
        out = jax.block_until_ready(out)

        Ho = (cfg["H"] + 2 - 3) // cfg["stride"] + 1
        Wo = (cfg["W"] + 2 - 3) // cfg["stride"] + 1
        assert out.shape == (cfg["B"], cfg["oup"], Ho, Wo)

        # Strict check against a reference using the same bf16/f32-acc precision.
        ref_strict = inverted_residual_ref(
            x, params, inp=cfg["inp"], oup=cfg["oup"], stride=cfg["stride"],
            expand_ratio=cfg["expand_ratio"], mirror_kernel_precision=True)
        if not jnp.allclose(out, ref_strict, rtol=2e-3, atol=2e-3):
            raise AssertionError(f"mismatch vs bf16-mirrored reference for {cfg}")

        # Loose check against the pure-f32 PyTorch-semantics reference.
        ref_f32 = inverted_residual_ref(
            x, params, inp=cfg["inp"], oup=cfg["oup"], stride=cfg["stride"],
            expand_ratio=cfg["expand_ratio"], mirror_kernel_precision=False)
        if not jnp.allclose(out, ref_f32, rtol=1e-1, atol=1e-1):
            raise AssertionError(f"mismatch vs f32 reference for {cfg}")

    print("KERNEL_OK")
</pallas_src>

<mosaic_0001>
module attributes {stable_mosaic.version = 11 : i64} {
  func.func @kernel(%arg0: i32, %arg1: i32, %arg2: memref<1x1x10x24x4xf32, #tpu.memory_space<vmem>>, %arg3: memref<1x10x24x1xf32, #tpu.memory_space<vmem>>, %arg4: memref<4x24xbf16, #tpu.memory_space<vmem>>, %arg5: memref<1x24xf32, #tpu.memory_space<vmem>>, %arg6: memref<3x3x24xf32, #tpu.memory_space<vmem>>, %arg7: memref<1x24xf32, #tpu.memory_space<vmem>>, %arg8: memref<24x4xbf16, #tpu.memory_space<vmem>>, %arg9: memref<1x4xf32, #tpu.memory_space<vmem>>, %arg10: memref<1x1x8x16x4xf32, #tpu.memory_space<vmem>>) attributes {dimension_semantics = [#tpu.dimension_semantics<parallel>, #tpu.dimension_semantics<parallel>], iteration_bounds = array<i64: 2, 2>, scalar_prefetch = 0 : i64, scratch_operands = 0 : i64, tpu.core_type = #tpu.core_type<tc>, window_params = [{transform_indices = @transform_0, window_bounds = array<i64: 1, 1, 10, 24, 4>}, {transform_indices = @transform_1, window_bounds = array<i64: 1, 10, 24, 1>}, {pipeline_mode = #tpu.pipeline_mode<synchronous>, transform_indices = @transform_2, window_bounds = array<i64: 4, 24>}, {pipeline_mode = #tpu.pipeline_mode<synchronous>, transform_indices = @transform_3, window_bounds = array<i64: 1, 24>}, {pipeline_mode = #tpu.pipeline_mode<synchronous>, transform_indices = @transform_4, window_bounds = array<i64: 3, 3, 24>}, {pipeline_mode = #tpu.pipeline_mode<synchronous>, transform_indices = @transform_5, window_bounds = array<i64: 1, 24>}, {pipeline_mode = #tpu.pipeline_mode<synchronous>, transform_indices = @transform_6, window_bounds = array<i64: 24, 4>}, {pipeline_mode = #tpu.pipeline_mode<synchronous>, transform_indices = @transform_7, window_bounds = array<i64: 1, 4>}, {transform_indices = @transform_8, window_bounds = array<i64: 1, 1, 8, 16, 4>}]} {
    %c0 = arith.constant 0 : index
    %c0_0 = arith.constant 0 : index
    %c0_1 = arith.constant 0 : index
    %c0_2 = arith.constant 0 : index
    %c0_3 = arith.constant 0 : index
    %0 = vector.load %arg2[%c0, %c0_0, %c0_1, %c0_2, %c0_3] : memref<1x1x10x24x4xf32, #tpu.memory_space<vmem>>, vector<1x1x10x24x4xf32>
    %1 = vector.shape_cast %0 : vector<1x1x10x24x4xf32> to vector<10x24x4xf32>
    %2 = vector.shape_cast %1 : vector<10x24x4xf32> to vector<240x4xf32>
    %3 = arith.truncf %2 : vector<240x4xf32> to vector<240x4xbf16>
    %c0_4 = arith.constant 0 : index
    %c0_5 = arith.constant 0 : index
    %4 = vector.load %arg4[%c0_4, %c0_5] : memref<4x24xbf16, #tpu.memory_space<vmem>>, vector<4x24xbf16>
    %cst = arith.constant dense<0.000000e+00> : vector<240x24xf32>
    %5 = tpu.matmul %3, %4, %cst {dimension_numbers = #tpu.dot_dimension_numbers<[1], [0], [0], [1], [0, 0, 1, 1], [], []>} : vector<240x4xbf16>, vector<4x24xbf16>, vector<240x24xf32> -> vector<240x24xf32>
    %c0_6 = arith.constant 0 : index
    %c0_7 = arith.constant 0 : index
    %6 = vector.load %arg5[%c0_6, %c0_7] : memref<1x24xf32, #tpu.memory_space<vmem>>, vector<1x24xf32>
    %7 = vector.broadcast %6 : vector<1x24xf32> to vector<240x24xf32>
    %8 = arith.addf %5, %7 : vector<240x24xf32>
    %cst_8 = arith.constant 0.000000e+00 : f32
    %cst_9 = arith.constant 6.000000e+00 : f32
    %9 = vector.broadcast %cst_8 : f32 to vector<240x24xf32>
    %10 = arith.maximumf %9, %8 : vector<240x24xf32>
    %11 = vector.broadcast %cst_9 : f32 to vector<240x24xf32>
    %12 = arith.minimumf %11, %10 : vector<240x24xf32>
    %13 = vector.shape_cast %12 : vector<240x24xf32> to vector<10x24x24xf32>
    %c0_10 = arith.constant 0 : index
    %c0_11 = arith.constant 0 : index
    %c0_12 = arith.constant 0 : index
    %c0_13 = arith.constant 0 : index
    %14 = vector.load %arg3[%c0_10, %c0_11, %c0_12, %c0_13] : memref<1x10x24x1xf32, #tpu.memory_space<vmem>>, vector<1x10x24x1xf32>
    %15 = vector.shape_cast %14 : vector<1x10x24x1xf32> to vector<10x24x1xf32>
    %16 = vector.broadcast %15 : vector<10x24x1xf32> to vector<10x24x24xf32>
    %17 = arith.mulf %13, %16 : vector<10x24x24xf32>
    %cst_14 = arith.constant 0.000000e+00 : f32
    %18 = vector.broadcast %cst_14 : f32 to vector<8x16x24xf32>
    %19 = vector.extract_strided_slice %17 {offsets = [0, 0, 0], sizes = [8, 16, 24], strides = [1, 1, 1]} : vector<10x24x24xf32> to vector<8x16x24xf32>
    %c0_15 = arith.constant 0 : index
    %c0_16 = arith.constant 0 : index
    %c0_17 = arith.constant 0 : index
    %20 = vector.load %arg6[%c0_15, %c0_16, %c0_17] : memref<3x3x24xf32, #tpu.memory_space<vmem>>, vector<1x1x24xf32>
    %21 = vector.shape_cast %20 : vector<1x1x24xf32> to vector<24xf32>
    %22 = vector.shape_cast %21 : vector<24xf32> to vector<1x1x24xf32>
    %23 = vector.broadcast %22 : vector<1x1x24xf32> to vector<8x16x24xf32>
    %24 = arith.mulf %19, %23 : vector<8x16x24xf32>
    %25 = arith.addf %18, %24 : vector<8x16x24xf32>
    %26 = vector.extract_strided_slice %17 {offsets = [0, 1, 0], sizes = [8, 16, 24], strides = [1, 1, 1]} : vector<10x24x24xf32> to vector<8x16x24xf32>
    %c0_18 = arith.constant 0 : index
    %c1 = arith.constant 1 : index
    %c0_19 = arith.constant 0 : index
    %27 = vector.load %arg6[%c0_18, %c1, %c0_19] : memref<3x3x24xf32, #tpu.memory_space<vmem>>, vector<1x1x24xf32>
    %28 = vector.shape_cast %27 : vector<1x1x24xf32> to vector<24xf32>
    %29 = vector.shape_cast %28 : vector<24xf32> to vector<1x1x24xf32>
    %30 = vector.broadcast %29 : vector<1x1x24xf32> to vector<8x16x24xf32>
    %31 = arith.mulf %26, %30 : vector<8x16x24xf32>
    %32 = arith.addf %25, %31 : vector<8x16x24xf32>
    %33 = vector.extract_strided_slice %17 {offsets = [0, 2, 0], sizes = [8, 16, 24], strides = [1, 1, 1]} : vector<10x24x24xf32> to vector<8x16x24xf32>
    %c0_20 = arith.constant 0 : index
    %c2 = arith.constant 2 : index
    %c0_21 = arith.constant 0 : index
    %34 = vector.load %arg6[%c0_20, %c2, %c0_21] : memref<3x3x24xf32, #tpu.memory_space<vmem>>, vector<1x1x24xf32>
    %35 = vector.shape_cast %34 : vector<1x1x24xf32> to vector<24xf32>
    %36 = vector.shape_cast %35 : vector<24xf32> to vector<1x1x24xf32>
    %37 = vector.broadcast %36 : vector<1x1x24xf32> to vector<8x16x24xf32>
    %38 = arith.mulf %33, %37 : vector<8x16x24xf32>
    %39 = arith.addf %32, %38 : vector<8x16x24xf32>
    %40 = vector.extract_strided_slice %17 {offsets = [1, 0, 0], sizes = [8, 16, 24], strides = [1, 1, 1]} : vector<10x24x24xf32> to vector<8x16x24xf32>
    %c1_22 = arith.constant 1 : index
    %c0_23 = arith.constant 0 : index
    %c0_24 = arith.constant 0 : index
    %41 = vector.load %arg6[%c1_22, %c0_23, %c0_24] : memref<3x3x24xf32, #tpu.memory_space<vmem>>, vector<1x1x24xf32>
    %42 = vector.shape_cast %41 : vector<1x1x24xf32> to vector<24xf32>
    %43 = vector.shape_cast %42 : vector<24xf32> to vector<1x1x24xf32>
    %44 = vector.broadcast %43 : vector<1x1x24xf32> to vector<8x16x24xf32>
    %45 = arith.mulf %40, %44 : vector<8x16x24xf32>
    %46 = arith.addf %39, %45 : vector<8x16x24xf32>
    %47 = vector.extract_strided_slice %17 {offsets = [1, 1, 0], sizes = [8, 16, 24], strides = [1, 1, 1]} : vector<10x24x24xf32> to vector<8x16x24xf32>
    %c1_25 = arith.constant 1 : index
    %c1_26 = arith.constant 1 : index
    %c0_27 = arith.constant 0 : index
    %48 = vector.load %arg6[%c1_25, %c1_26, %c0_27] : memref<3x3x24xf32, #tpu.memory_space<vmem>>, vector<1x1x24xf32>
    %49 = vector.shape_cast %48 : vector<1x1x24xf32> to vector<24xf32>
    %50 = vector.shape_cast %49 : vector<24xf32> to vector<1x1x24xf32>
    %51 = vector.broadcast %50 : vector<1x1x24xf32> to vector<8x16x24xf32>
    %52 = arith.mulf %47, %51 : vector<8x16x24xf32>
    %53 = arith.addf %46, %52 : vector<8x16x24xf32>
    %54 = vector.extract_strided_slice %17 {offsets = [1, 2, 0], sizes = [8, 16, 24], strides = [1, 1, 1]} : vector<10x24x24xf32> to vector<8x16x24xf32>
    %c1_28 = arith.constant 1 : index
    %c2_29 = arith.constant 2 : index
    %c0_30 = arith.constant 0 : index
    %55 = vector.load %arg6[%c1_28, %c2_29, %c0_30] : memref<3x3x24xf32, #tpu.memory_space<vmem>>, vector<1x1x24xf32>
    %56 = vector.shape_cast %55 : vector<1x1x24xf32> to vector<24xf32>
    %57 = vector.shape_cast %56 : vector<24xf32> to vector<1x1x24xf32>
    %58 = vector.broadcast %57 : vector<1x1x24xf32> to vector<8x16x24xf32>
    %59 = arith.mulf %54, %58 : vector<8x16x24xf32>
    %60 = arith.addf %53, %59 : vector<8x16x24xf32>
    %61 = vector.extract_strided_slice %17 {offsets = [2, 0, 0], sizes = [8, 16, 24], strides = [1, 1, 1]} : vector<10x24x24xf32> to vector<8x16x24xf32>
    %c2_31 = arith.constant 2 : index
    %c0_32 = arith.constant 0 : index
    %c0_33 = arith.constant 0 : index
    %62 = vector.load %arg6[%c2_31, %c0_32, %c0_33] : memref<3x3x24xf32, #tpu.memory_space<vmem>>, vector<1x1x24xf32>
    %63 = vector.shape_cast %62 : vector<1x1x24xf32> to vector<24xf32>
    %64 = vector.shape_cast %63 : vector<24xf32> to vector<1x1x24xf32>
    %65 = vector.broadcast %64 : vector<1x1x24xf32> to vector<8x16x24xf32>
    %66 = arith.mulf %61, %65 : vector<8x16x24xf32>
    %67 = arith.addf %60, %66 : vector<8x16x24xf32>
    %68 = vector.extract_strided_slice %17 {offsets = [2, 1, 0], sizes = [8, 16, 24], strides = [1, 1, 1]} : vector<10x24x24xf32> to vector<8x16x24xf32>
    %c2_34 = arith.constant 2 : index
    %c1_35 = arith.constant 1 : index
    %c0_36 = arith.constant 0 : index
    %69 = vector.load %arg6[%c2_34, %c1_35, %c0_36] : memref<3x3x24xf32, #tpu.memory_space<vmem>>, vector<1x1x24xf32>
    %70 = vector.shape_cast %69 : vector<1x1x24xf32> to vector<24xf32>
    %71 = vector.shape_cast %70 : vector<24xf32> to vector<1x1x24xf32>
    %72 = vector.broadcast %71 : vector<1x1x24xf32> to vector<8x16x24xf32>
    %73 = arith.mulf %68, %72 : vector<8x16x24xf32>
    %74 = arith.addf %67, %73 : vector<8x16x24xf32>
    %75 = vector.extract_strided_slice %17 {offsets = [2, 2, 0], sizes = [8, 16, 24], strides = [1, 1, 1]} : vector<10x24x24xf32> to vector<8x16x24xf32>
    %c2_37 = arith.constant 2 : index
    %c2_38 = arith.constant 2 : index
    %c0_39 = arith.constant 0 : index
    %76 = vector.load %arg6[%c2_37, %c2_38, %c0_39] : memref<3x3x24xf32, #tpu.memory_space<vmem>>, vector<1x1x24xf32>
    %77 = vector.shape_cast %76 : vector<1x1x24xf32> to vector<24xf32>
    %78 = vector.shape_cast %77 : vector<24xf32> to vector<1x1x24xf32>
    %79 = vector.broadcast %78 : vector<1x1x24xf32> to vector<8x16x24xf32>
    %80 = arith.mulf %75, %79 : vector<8x16x24xf32>
    %81 = arith.addf %74, %80 : vector<8x16x24xf32>
    %c0_40 = arith.constant 0 : index
    %c0_41 = arith.constant 0 : index
    %82 = vector.load %arg7[%c0_40, %c0_41] : memref<1x24xf32, #tpu.memory_space<vmem>>, vector<1x24xf32>
    %83 = vector.shape_cast %82 : vector<1x24xf32> to vector<1x1x24xf32>
    %84 = vector.broadcast %83 : vector<1x1x24xf32> to vector<8x16x24xf32>
    %85 = arith.addf %81, %84 : vector<8x16x24xf32>
    %cst_42 = arith.constant 0.000000e+00 : f32
    %cst_43 = arith.constant 6.000000e+00 : f32
    %86 = vector.broadcast %cst_42 : f32 to vector<8x16x24xf32>
    %87 = arith.maximumf %86, %85 : vector<8x16x24xf32>
    %88 = vector.broadcast %cst_43 : f32 to vector<8x16x24xf32>
    %89 = arith.minimumf %88, %87 : vector<8x16x24xf32>
    %90 = vector.shape_cast %89 : vector<8x16x24xf32> to vector<128x24xf32>
    %91 = arith.truncf %90 : vector<128x24xf32> to vector<128x24xbf16>
    %c0_44 = arith.constant 0 : index
    %c0_45 = arith.constant 0 : index
    %92 = vector.load %arg8[%c0_44, %c0_45] : memref<24x4xbf16, #tpu.memory_space<vmem>>, vector<24x4xbf16>
    %cst_46 = arith.constant dense<0.000000e+00> : vector<128x4xf32>
    %93 = tpu.matmul %91, %92, %cst_46 {dimension_numbers = #tpu.dot_dimension_numbers<[1], [0], [0], [1], [0, 0, 1, 1], [], []>} : vector<128x24xbf16>, vector<24x4xbf16>, vector<128x4xf32> -> vector<128x4xf32>
    %c0_47 = arith.constant 0 : index
    %c0_48 = arith.constant 0 : index
    %94 = vector.load %arg9[%c0_47, %c0_48] : memref<1x4xf32, #tpu.memory_space<vmem>>, vector<1x4xf32>
    %95 = vector.broadcast %94 : vector<1x4xf32> to vector<128x4xf32>
    %96 = arith.addf %93, %95 : vector<128x4xf32>
    %97 = vector.shape_cast %96 : vector<128x4xf32> to vector<8x16x4xf32>
    %98 = vector.extract_strided_slice %1 {offsets = [1, 1, 0], sizes = [8, 16, 4], strides = [1, 1, 1]} : vector<10x24x4xf32> to vector<8x16x4xf32>
    %99 = arith.addf %97, %98 : vector<8x16x4xf32>
    %c0_49 = arith.constant 0 : index
    %c0_50 = arith.constant 0 : index
    %c0_51 = arith.constant 0 : index
    %c0_52 = arith.constant 0 : index
    %c0_53 = arith.constant 0 : index
    %100 = vector.load %arg10[%c0_49, %c0_50, %c0_51, %c0_52, %c0_53] : memref<1x1x8x16x4xf32, #tpu.memory_space<vmem>>, vector<1x1x8x16x4xf32>
    %101 = vector.shape_cast %100 : vector<1x1x8x16x4xf32> to vector<8x16x4xf32>
    %102 = vector.shape_cast %99 : vector<8x16x4xf32> to vector<1x1x8x16x4xf32>
    tpu.vector_store %arg10[%c0_49, %c0_50, %c0_51, %c0_52, %c0_53], %102 {strides = array<i32>} : memref<1x1x8x16x4xf32, #tpu.memory_space<vmem>>, vector<1x1x8x16x4xf32>,
    return
  }
  func.func @transform_0(%arg0: i32, %arg1: i32) -> (i32, i32, i32, i32, i32) {
    %c0_i32 = arith.constant 0 : i32
    %c0_i32_0 = arith.constant 0 : i32
    %c0_i32_1 = arith.constant 0 : i32
    %c0_i32_2 = arith.constant 0 : i32
    return %arg0, %arg1, %c0_i32, %c0_i32_0, %c0_i32_1 : i32, i32, i32, i32, i32
  }
  func.func @transform_1(%arg0: i32, %arg1: i32) -> (i32, i32, i32, i32) {
    %c0_i32 = arith.constant 0 : i32
    %c0_i32_0 = arith.constant 0 : i32
    %c0_i32_1 = arith.constant 0 : i32
    %c0_i32_2 = arith.constant 0 : i32
    return %arg1, %c0_i32, %c0_i32_0, %c0_i32_1 : i32, i32, i32, i32
  }
  func.func @transform_2(%arg0: i32, %arg1: i32) -> (i32, i32) {
    %c0_i32 = arith.constant 0 : i32
    %c0_i32_0 = arith.constant 0 : i32
    %c0_i32_1 = arith.constant 0 : i32
    return %c0_i32, %c0_i32_0 : i32, i32
  }
  func.func @transform_3(%arg0: i32, %arg1: i32) -> (i32, i32) {
    %c0_i32 = arith.constant 0 : i32
    %c0_i32_0 = arith.constant 0 : i32
    %c0_i32_1 = arith.constant 0 : i32
    return %c0_i32, %c0_i32_0 : i32, i32
  }
  func.func @transform_4(%arg0: i32, %arg1: i32) -> (i32, i32, i32) {
    %c0_i32 = arith.constant 0 : i32
    %c0_i32_0 = arith.constant 0 : i32
    %c0_i32_1 = arith.constant 0 : i32
    %c0_i32_2 = arith.constant 0 : i32
    return %c0_i32, %c0_i32_0, %c0_i32_1 : i32, i32, i32
  }
  func.func @transform_5(%arg0: i32, %arg1: i32) -> (i32, i32) {
    %c0_i32 = arith.constant 0 : i32
    %c0_i32_0 = arith.constant 0 : i32
    %c0_i32_1 = arith.constant 0 : i32
    return %c0_i32, %c0_i32_0 : i32, i32
  }
  func.func @transform_6(%arg0: i32, %arg1: i32) -> (i32, i32) {
    %c0_i32 = arith.constant 0 : i32
    %c0_i32_0 = arith.constant 0 : i32
    %c0_i32_1 = arith.constant 0 : i32
    return %c0_i32, %c0_i32_0 : i32, i32
  }
  func.func @transform_7(%arg0: i32, %arg1: i32) -> (i32, i32) {
    %c0_i32 = arith.constant 0 : i32
    %c0_i32_0 = arith.constant 0 : i32
    %c0_i32_1 = arith.constant 0 : i32
    return %c0_i32, %c0_i32_0 : i32, i32
  }
  func.func @transform_8(%arg0: i32, %arg1: i32) -> (i32, i32, i32, i32, i32) {
    %c0_i32 = arith.constant 0 : i32
    %c0_i32_0 = arith.constant 0 : i32
    %c0_i32_1 = arith.constant 0 : i32
    %c0_i32_2 = arith.constant 0 : i32
    return %arg0, %arg1, %c0_i32, %c0_i32_0, %c0_i32_1 : i32, i32, i32, i32, i32
  }
}

</mosaic_0001>

<llo_original>
// kernel: tpu_custom_call.1
$region0: #{tpu_custom_call.1}
  #allocation0 [shape = 'u32[]', space=smem, size = 0x4, offset = 0x4, fixed_abs, tag = 'smem constant byte address 0x4 - core index']
  #allocation1 [shape = 'u32[144,128]{1,0:T(1,128)}', space=vmem, size = 0x12000, scoped, tag = 'internal scratch']
  %s0 = inlined_call_operand.hbm [shape: f32[2,2,10,24,4], index: 0, kind: input, shape index: {}]
  %s1 = inlined_call_operand.hbm [shape: f32[2,10,24,1], index: 1, kind: input, shape index: {}]
  %s2 = inlined_call_operand.hbm [shape: bf16[4,24], index: 2, kind: input, shape index: {}]
  %s3 = inlined_call_operand.hbm [shape: f32[1,24], index: 3, kind: input, shape index: {}]
  %s4 = inlined_call_operand.hbm [shape: f32[3,3,24], index: 4, kind: input, shape index: {}]
  %s5 = inlined_call_operand.hbm [shape: f32[1,24], index: 5, kind: input, shape index: {}]
  %s6 = inlined_call_operand.hbm [shape: bf16[24,4], index: 6, kind: input, shape index: {}]
  %s7 = inlined_call_operand.hbm [shape: f32[1,4], index: 7, kind: input, shape index: {}]
  %s8 = inlined_call_operand.hbm [shape: f32[2,2,8,16,4], index: 8, kind: output, shape index: {}]
  %s9 = sld [smem:[#allocation0]]
  $region97: #{tpu_custom_call.1} parent=0
    _
  %s11 = ssub.s32 1, %s9
  %s12 = scalar_select 0, %s11, %s9
  $region1: #{tpu_custom_call.1} parent=0
    #allocation2 [shape = 'u8[245760]{0}', space=vmem, size = 0x3c000, scoped, tag = 'input window, operand 0']
    #allocation3 [shape = 's32[2]{0}', space=sflag, size = 0x8, scoped, tag = 'scoped memory for tpu_custom_call.1']
    #allocation4 [shape = 's32[2]{0}', space=sflag, size = 0x8, scoped, tag = 'scoped memory for tpu_custom_call.1']
    #allocation5 [shape = 'u8[245760]{0}', space=vmem, size = 0x3c000, scoped, tag = 'input window, operand 1']
    #allocation6 [shape = 's32[2]{0}', space=sflag, size = 0x8, scoped, tag = 'scoped memory for tpu_custom_call.1']
    #allocation7 [shape = 'u8[1024]{0}', space=vmem, size = 0x400, scoped, tag = 'input window, operand 2, single buffered']
    #allocation8 [shape = 'u8[512]{0}', space=vmem, size = 0x400, scoped, tag = 'input window, operand 3, single buffered']
    #allocation9 [shape = 's32[1]{0}', space=sflag, size = 0x4, scoped, tag = 'scoped memory for tpu_custom_call.1']
    #allocation10 [shape = 'u8[6144]{0}', space=vmem, size = 0x1800, scoped, tag = 'input window, operand 4, single buffered']
    #allocation11 [shape = 'u8[512]{0}', space=vmem, size = 0x400, scoped, tag = 'input window, operand 5, single buffered']
    #allocation12 [shape = 's32[1]{0}', space=sflag, size = 0x4, scoped, tag = 'scoped memory for tpu_custom_call.1']
    #allocation13 [shape = 'u8[6144]{0}', space=vmem, size = 0x1800, scoped, tag = 'input window, operand 6, single buffered']
    #allocation14 [shape = 'u8[512]{0}', space=vmem, size = 0x400, scoped, tag = 'input window, operand 7, single buffered']
    #allocation15 [shape = 's32[1]{0}', space=sflag, size = 0x4, scoped, tag = 'scoped memory for tpu_custom_call.1']
    #allocation16 [shape = 'u8[131072]{0}', space=vmem, size = 0x20000, scoped, tag = 'output window, operand 0']
    %13 = vsyncpa [#allocation3], 0
    %s14 = scalar_lea.sflag [#allocation3], 1
    %15 = vsyncpa %s14, 0
    %16 = vsyncpa [#allocation6], 0
    %s17 = scalar_lea.sflag [#allocation6], 1
    %18 = vsyncpa %s17, 0
    %19 = vsyncpa [#allocation9], 0
    %20 = vsyncpa [#allocation12], 0
    %21 = vsyncpa [#allocation15], 0
    %22 = vsyncpa [#allocation4], 0
    %s23 = scalar_lea.sflag [#allocation4], 1
    %24 = vsyncpa %s23, 0
    loop: start=0, step=1, limit=6
    $region2: #{tpu_custom_call.1} parent=1 // loop_pre_header
      _
    $region3: #{tpu_custom_call.1} parent=1 // loop_header
      %s26 = sphi 0, %s30
      %p27 = scmp.ge.s32.totalorder %s26, 6
      %s33 = sphi 0, %s45
      %s34 = sphi 0, %s41
      %s35 = sphi 0, %s33
      %s36 = sphi 0, %s34
      %s37 = sphi 0, %s35
      %s38 = sphi 0, %s36
      %s50 = sphi 0, %s52
      %s53 = sphi 0, %s50
      %s54 = sphi 0, %s53
      %s70 = sphi 0, %s54
      %s76 = sphi 0, %s78
      %s79 = sphi 0, %s76
      %s80 = sphi 0, %s79
      %s96 = sphi 0, %s80
      %s100 = sphi 0, %s100
      %s102 = sphi 0, %s100
      %s103 = sphi 0, %s102
      %s117 = sphi 0, %s103
      %s121 = sphi 0, %s121
      %s123 = sphi 0, %s121
      %s124 = sphi 0, %s123
      %s138 = sphi 0, %s124
      %s142 = sphi 0, %s142
      %s144 = sphi 0, %s142
      %s145 = sphi 0, %s144
      %s159 = sphi 0, %s145
      %s163 = sphi 0, %s163
      %s165 = sphi 0, %s163
      %s166 = sphi 0, %s165
      %s180 = sphi 0, %s166
      %s184 = sphi 0, %s184
      %s186 = sphi 0, %s184
      %s187 = sphi 0, %s186
      %s201 = sphi 0, %s187
      %s205 = sphi 0, %s205
      %s207 = sphi 0, %s205
      %s208 = sphi 0, %s207
      %s222 = sphi 0, %s208
      %s230 = sphi 0, %s232
      %s233 = sphi 0, %s230
      %s234 = sphi 0, %s233
      %s250 = sphi 0, %s234
    $region4: #{tpu_custom_call.1} parent=1 // loop_header_branch
      %29 = sbr.rel (%p27) target = $region8
    $region5: #{tpu_custom_call.1} parent=1 // loop_body
      %s31 = ssub.s32 %s26, 1
      %s32 = ssub.s32 %s26, 2
      %s39 = sadd.s32 1, %s34
      %p40 = scmp.ge.s32.totalorder %s39, 2
      %s41 = scalar_select %p40, 0, %s39
      %s42 = sadd.s32 1, %s33
      %s43 = scalar_select %p40, %s42, %s33
      %p44 = scmp.ge.s32.totalorder %s43, 2
      %s45 = scalar_select %p44, 0, %s43
      %s46 = ssub.s32 %s33, %s45
      %s47 = ssub.s32 %s34, %s41
      %s48 = sor.u32 %s46, %s47
      %p49 = scmp.eq.s32.totalorder %s48, 0
      %s51 = sadd.s32 %s50, 1
      %s52 = scalar_select %p49, %s50, %s51
      %p55 = pneg %p49
      %p56 = scmp.eq.s32.totalorder %s26, 3
      %p57 = por %p55, %p56
      %p58 = scmp.ne.s32.totalorder %s50, %s53
      %p59 = scmp.eq.s32.totalorder %s26, 0
      %p60 = por %p58, %p59
      %p61 = scmp.ne.s32.totalorder %s50, %s53
      %p62 = scmp.eq.s32.totalorder %s31, 3
      %p63 = por %p61, %p62
      %p64 = scmp.ne.s32.totalorder %s53, %s54
      %p65 = scmp.eq.s32.totalorder %s31, 0
      %p66 = por %p64, %p65
      %p67 = scmp.ne.s32.totalorder %s53, %s54
      %p68 = scmp.eq.s32.totalorder %s32, 3
      %p69 = por %p67, %p68
      %p71 = scmp.ne.s32.totalorder %s54, %s70
      %p72 = scmp.eq.s32.totalorder %s32, 0
      %p73 = por %p71, %p72
      %s74 = ssub.s32 %s34, %s41
      %p75 = scmp.eq.s32.totalorder %s74, 0
      %s77 = sadd.s32 %s76, 1
      %s78 = scalar_select %p75, %s76, %s77
      %p81 = pneg %p75
      %p82 = scmp.eq.s32.totalorder %s26, 3
      %p83 = por %p81, %p82
      %p84 = scmp.ne.s32.totalorder %s76, %s79
      %p85 = scmp.eq.s32.totalorder %s26, 0
      %p86 = por %p84, %p85
      %p87 = scmp.ne.s32.totalorder %s76, %s79
      %p88 = scmp.eq.s32.totalorder %s31, 3
      %p89 = por %p87, %p88
      %p90 = scmp.ne.s32.totalorder %s79, %s80
      %p91 = scmp.eq.s32.totalorder %s31, 0
      %p92 = por %p90, %p91
      %p93 = scmp.ne.s32.totalorder %s79, %s80
      %p94 = scmp.eq.s32.totalorder %s32, 3
      %p95 = por %p93, %p94
      %p97 = scmp.ne.s32.totalorder %s80, %s96
      %p98 = scmp.eq.s32.totalorder %s32, 0
      %p99 = por %p97, %p98
      %s101 = sadd.s32 %s100, 1
      %p104 = scmp.eq.s32.totalorder %s26, 3
      %p105 = scmp.ne.s32.totalorder %s100, %s102
      %p106 = scmp.eq.s32.totalorder %s26, 0
      %p107 = por %p105, %p106
      %p108 = scmp.ne.s32.totalorder %s100, %s102
      %p109 = scmp.eq.s32.totalorder %s31, 3
      %p110 = por %p108, %p109
      %p111 = scmp.ne.s32.totalorder %s102, %s103
      %p112 = scmp.eq.s32.totalorder %s31, 0
      %p113 = por %p111, %p112
      %p114 = scmp.ne.s32.totalorder %s102, %s103
      %p115 = scmp.eq.s32.totalorder %s32, 3
      %p116 = por %p114, %p115
      %p118 = scmp.ne.s32.totalorder %s103, %s117
      %p119 = scmp.eq.s32.totalorder %s32, 0
      %p120 = por %p118, %p119
      %s122 = sadd.s32 %s121, 1
      %p125 = scmp.eq.s32.totalorder %s26, 3
      %p126 = scmp.ne.s32.totalorder %s121, %s123
      %p127 = scmp.eq.s32.totalorder %s26, 0
      %p128 = por %p126, %p127
      %p129 = scmp.ne.s32.totalorder %s121, %s123
      %p130 = scmp.eq.s32.totalorder %s31, 3
      %p131 = por %p129, %p130
      %p132 = scmp.ne.s32.totalorder %s123, %s124
      %p133 = scmp.eq.s32.totalorder %s31, 0
      %p134 = por %p132, %p133
      %p135 = scmp.ne.s32.totalorder %s123, %s124
      %p136 = scmp.eq.s32.totalorder %s32, 3
      %p137 = por %p135, %p136
      %p139 = scmp.ne.s32.totalorder %s124, %s138
      %p140 = scmp.eq.s32.totalorder %s32, 0
      %p141 = por %p139, %p140
      %s143 = sadd.s32 %s142, 1
      %p146 = scmp.eq.s32.totalorder %s26, 3
      %p147 = scmp.ne.s32.totalorder %s142, %s144
      %p148 = scmp.eq.s32.totalorder %s26, 0
      %p149 = por %p147, %p148
      %p150 = scmp.ne.s32.totalorder %s142, %s144
      %p151 = scmp.eq.s32.totalorder %s31, 3
      %p152 = por %p150, %p151
      %p153 = scmp.ne.s32.totalorder %s144, %s145
      %p154 = scmp.eq.s32.totalorder %s31, 0
      %p155 = por %p153, %p154
      %p156 = scmp.ne.s32.totalorder %s144, %s145
      %p157 = scmp.eq.s32.totalorder %s32, 3
      %p158 = por %p156, %p157
      %p160 = scmp.ne.s32.totalorder %s145, %s159
      %p161 = scmp.eq.s32.totalorder %s32, 0
      %p162 = por %p160, %p161
      %s164 = sadd.s32 %s163, 1
      %p167 = scmp.eq.s32.totalorder %s26, 3
      %p168 = scmp.ne.s32.totalorder %s163, %s165
      %p169 = scmp.eq.s32.totalorder %s26, 0
      %p170 = por %p168, %p169
      %p171 = scmp.ne.s32.totalorder %s163, %s165
      %p172 = scmp.eq.s32.totalorder %s31, 3
      %p173 = por %p171, %p172
      %p174 = scmp.ne.s32.totalorder %s165, %s166
      %p175 = scmp.eq.s32.totalorder %s31, 0
      %p176 = por %p174, %p175
      %p177 = scmp.ne.s32.totalorder %s165, %s166
      %p178 = scmp.eq.s32.totalorder %s32, 3
      %p179 = por %p177, %p178
      %p181 = scmp.ne.s32.totalorder %s166, %s180
      %p182 = scmp.eq.s32.totalorder %s32, 0
      %p183 = por %p181, %p182
      %s185 = sadd.s32 %s184, 1
      %p188 = scmp.eq.s32.totalorder %s26, 3
      %p189 = scmp.ne.s32.totalorder %s184, %s186
      %p190 = scmp.eq.s32.totalorder %s26, 0
      %p191 = por %p189, %p190
      %p192 = scmp.ne.s32.totalorder %s184, %s186
      %p193 = scmp.eq.s32.totalorder %s31, 3
      %p194 = por %p192, %p193
      %p195 = scmp.ne.s32.totalorder %s186, %s187
      %p196 = scmp.eq.s32.totalorder %s31, 0
      %p197 = por %p195, %p196
      %p198 = scmp.ne.s32.totalorder %s186, %s187
      %p199 = scmp.eq.s32.totalorder %s32, 3
      %p200 = por %p198, %p199
      %p202 = scmp.ne.s32.totalorder %s187, %s201
      %p203 = scmp.eq.s32.totalorder %s32, 0
      %p204 = por %p202, %p203
      %s206 = sadd.s32 %s205, 1
      %p209 = scmp.eq.s32.totalorder %s26, 3
      %p210 = scmp.ne.s32.totalorder %s205, %s207
      %p211 = scmp.eq.s32.totalorder %s26, 0
      %p212 = por %p210, %p211
      %p213 = scmp.ne.s32.totalorder %s205, %s207
      %p214 = scmp.eq.s32.totalorder %s31, 3
      %p215 = por %p213, %p214
      %p216 = scmp.ne.s32.totalorder %s207, %s208
      %p217 = scmp.eq.s32.totalorder %s31, 0
      %p218 = por %p216, %p217
      %p219 = scmp.ne.s32.totalorder %s207, %s208
      %p220 = scmp.eq.s32.totalorder %s32, 3
      %p221 = por %p219, %p220
      %p223 = scmp.ne.s32.totalorder %s208, %s222
      %p224 = scmp.eq.s32.totalorder %s32, 0
      %p225 = por %p223, %p224
      %s226 = ssub.s32 %s33, %s45
      %s227 = ssub.s32 %s34, %s41
      %s228 = sor.u32 %s226, %s227
      %p229 = scmp.eq.s32.totalorder %s228, 0
      %s231 = sadd.s32 %s230, 1
      %s232 = scalar_select %p229, %s230, %s231
      %p235 = pneg %p229
      %p236 = scmp.eq.s32.totalorder %s26, 3
      %p237 = por %p235, %p236
      %p238 = scmp.ne.s32.totalorder %s230, %s233
      %p239 = scmp.eq.s32.totalorder %s26, 0
      %p240 = por %p238, %p239
      %p241 = scmp.ne.s32.totalorder %s230, %s233
      %p242 = scmp.eq.s32.totalorder %s31, 3
      %p243 = por %p241, %p242
      %p244 = scmp.ne.s32.totalorder %s233, %s234
      %p245 = scmp.eq.s32.totalorder %s31, 0
      %p246 = por %p244, %p245
      %p247 = scmp.ne.s32.totalorder %s233, %s234
      %p248 = scmp.eq.s32.totalorder %s32, 3
      %p249 = por %p247, %p248
      %p251 = scmp.ne.s32.totalorder %s234, %s250
      %p252 = scmp.eq.s32.totalorder %s32, 0
      %p253 = por %p251, %p252
      %p254 = scmp.le.s32.totalorder 1, %s26
      %p255 = scmp.lt.s32.totalorder %s26, 5
      %p256 = pnand %p254, %p255
      %p257 = pneg %p256
      // Predicated region
      $region9: #{tpu_custom_call.1} parent=5 // pred_check
        _
      $region10: #{tpu_custom_call.1} parent=5 // pred_check_branch
        %259 = sbr.rel (%p256) target = $region12
      $region11: #{tpu_custom_call.1} parent=5 // pred_region
        %s260 = ssub.s32 %s26, 1
        // Predicated region
        $region13: #{tpu_custom_call.1} parent=11 // pred_check
          %p261 = pneg %p113
        $region14: #{tpu_custom_call.1} parent=11 // pred_check_branch
          %263 = sbr.rel (%p261) target = $region16
        $region15: #{tpu_custom_call.1} parent=11 // pred_region
          %s265 = ssub.s32 32, 32
          %266 = vsyncadd [#allocation6], %s265
          %s268 = sshll.u32 [#allocation7], 4
          %s269 = int_to_ptr.vmem [resolvable:$true] %s268
          %271 = dma.hbm_to_vmem [thread:$0]  %s2, 32, %s269, [#allocation6]
        $region16: #{tpu_custom_call.1} parent=11 // pred_fallthru
          _
        // Predicated region
        $region17: #{tpu_custom_call.1} parent=11 // pred_check
          %p272 = pneg %p134
        $region18: #{tpu_custom_call.1} parent=11 // pred_check_branch
          %274 = sbr.rel (%p272) target = $region20
        $region19: #{tpu_custom_call.1} parent=11 // pred_region
          %s276 = ssub.s32 16, 16
          %277 = vsyncadd [#allocation9], %s276
          %s279 = sshll.u32 [#allocation8], 4
          %s280 = int_to_ptr.vmem [resolvable:$true] %s279
          %282 = dma.hbm_to_vmem [thread:$0]  %s3, 16, %s280, [#allocation9]
        $region20: #{tpu_custom_call.1} parent=11 // pred_fallthru
          _
        // Predicated region
        $region21: #{tpu_custom_call.1} parent=11 // pred_check
          %p283 = pneg %p155
        $region22: #{tpu_custom_call.1} parent=11 // pred_check_branch
          %285 = sbr.rel (%p283) target = $region24
        $region23: #{tpu_custom_call.1} parent=11 // pred_region
          %s287 = ssub.s32 192, 192
          %288 = vsyncadd [#allocation9], %s287
          %s289 = sshll.u32 [#allocation10], 4
          %s290 = int_to_ptr.vmem [resolvable:$true] %s289
          %295 = dma.hbm_to_vmem [thread:$0]  %s4, 192, %s290, [#allocation9], 64, 64, 4
        $region24: #{tpu_custom_call.1} parent=11 // pred_fallthru
          _
        // Predicated region
        $region25: #{tpu_custom_call.1} parent=11 // pred_check
          %p296 = pneg %p176
        $region26: #{tpu_custom_call.1} parent=11 // pred_check_branch
          %298 = sbr.rel (%p296) target = $region28
        $region27: #{tpu_custom_call.1} parent=11 // pred_region
          %s300 = ssub.s32 16, 16
          %301 = vsyncadd [#allocation12], %s300
          %s303 = sshll.u32 [#allocation11], 4
          %s304 = int_to_ptr.vmem [resolvable:$true] %s303
          %306 = dma.hbm_to_vmem [thread:$0]  %s5, 16, %s304, [#allocation12]
        $region28: #{tpu_custom_call.1} parent=11 // pred_fallthru
          _
        // Predicated region
        $region29: #{tpu_custom_call.1} parent=11 // pred_check
          %p307 = pneg %p197
        $region30: #{tpu_custom_call.1} parent=11 // pred_check_branch
          %309 = sbr.rel (%p307) target = $region32
        $region31: #{tpu_custom_call.1} parent=11 // pred_region
          %s311 = ssub.s32 192, 192
          %312 = vsyncadd [#allocation12], %s311
          %s313 = sshll.u32 [#allocation13], 4
          %s314 = int_to_ptr.vmem [resolvable:$true] %s313
          %319 = dma.hbm_to_vmem [thread:$0]  %s6, 192, %s314, [#allocation12], 64, 64, 4
        $region32: #{tpu_custom_call.1} parent=11 // pred_fallthru
          _
        // Predicated region
        $region33: #{tpu_custom_call.1} parent=11 // pred_check
          %p320 = pneg %p218
        $region34: #{tpu_custom_call.1} parent=11 // pred_check_branch
          %322 = sbr.rel (%p320) target = $region36
        $region35: #{tpu_custom_call.1} parent=11 // pred_region
          %s324 = ssub.s32 16, 16
          %325 = vsyncadd [#allocation15], %s324
          %s327 = sshll.u32 [#allocation14], 4
          %s328 = int_to_ptr.vmem [resolvable:$true] %s327
          %330 = dma.hbm_to_vmem [thread:$0]  %s7, 16, %s328, [#allocation15]
        $region36: #{tpu_custom_call.1} parent=11 // pred_fallthru
          _
      $region12: #{tpu_custom_call.1} parent=5 // pred_fallthru
        _
      %p331 = scmp.lt.s32.totalorder %s26, 4
      // Predicated region
      $region37: #{tpu_custom_call.1} parent=5 // pred_check
        %p332 = pneg %p331
      $region38: #{tpu_custom_call.1} parent=5 // pred_check_branch
        %334 = sbr.rel (%p332) target = $region40
      $region39: #{tpu_custom_call.1} parent=5 // pred_region
        // Predicated region
        $region41: #{tpu_custom_call.1} parent=39 // pred_check
          %p335 = pneg %p60
        $region42: #{tpu_custom_call.1} parent=39 // pred_check_branch
          %337 = sbr.rel (%p335) target = $region44
        $region43: #{tpu_custom_call.1} parent=39 // pred_region
          %s338 = sand.u32 %s50, 1
          %s339 = scalar_lea.sflag [#allocation3], %s338
          %s340 = sand.u32 %s50, 1
          %s341 = smul.addr %s340, 240
          %s342 = scalar_lea.vmem [#allocation2], %s341
          %s344 = ssub.s32 3840, 3840
          %345 = vsyncadd %s339, %s344
          %s346 = smul.addr %s34, 30
          %s347 = smul.addr %s33, 60
          %s348 = sadd.s32 %s346, %s347
          %s349 = smul.addr %s348, 128
          %s350 = scalar_lea.hbm %s0, %s349
          %s351 = sshll.u32 %s342, 4
          %s352 = int_to_ptr.vmem [resolvable:$true] %s351
          %357 = dma.hbm_to_vmem [thread:$0]  %s350, 3840, %s352, %s339, 128, 128, 8
        $region44: #{tpu_custom_call.1} parent=39 // pred_fallthru
          _
        // Predicated region
        $region45: #{tpu_custom_call.1} parent=39 // pred_check
          %p358 = pneg %p86
        $region46: #{tpu_custom_call.1} parent=39 // pred_check_branch
          %360 = sbr.rel (%p358) target = $region48
        $region47: #{tpu_custom_call.1} parent=39 // pred_region
          %s361 = sand.u32 %s26, 1
          %s362 = scalar_lea.sflag [#allocation6], %s361
          %s363 = sand.u32 %s76, 1
          %s364 = smul.addr %s363, 240
          %s365 = scalar_lea.vmem [#allocation5], %s364
          %s367 = ssub.s32 3840, 3840
          %368 = vsyncadd %s362, %s367
          %s369 = smul.addr %s34, 30
          %s370 = smul.addr %s369, 128
          %s371 = scalar_lea.hbm %s1, %s370
          %s372 = sshll.u32 %s365, 4
          %s373 = int_to_ptr.vmem [resolvable:$true] %s372
          %378 = dma.hbm_to_vmem [thread:$0]  %s371, 3840, %s373, %s362, 128, 128, 8
        $region48: #{tpu_custom_call.1} parent=39 // pred_fallthru
          _
      $region40: #{tpu_custom_call.1} parent=5 // pred_fallthru
        _
      %p379 = scmp.le.s32.totalorder 1, %s26
      %p380 = scmp.lt.s32.totalorder %s26, 5
      %p381 = pnand %p379, %p380
      %p382 = pneg %p381
      // Predicated region
      $region49: #{tpu_custom_call.1} parent=5 // pred_check
        _
      $region50: #{tpu_custom_call.1} parent=5 // pred_check_branch
        %384 = sbr.rel (%p381) target = $region52
      $region51: #{tpu_custom_call.1} parent=5 // pred_region
        %s385 = ssub.s32 %s26, 1
        %s386 = sand.u32 %s53, 1
        %s387 = scalar_lea.sflag [#allocation3], %s386
        %s388 = sand.u32 %s53, 1
        %s389 = smul.addr %s388, 240
        %s390 = scalar_lea.vmem [#allocation2], %s389
        // Predicated region
        $region53: #{tpu_custom_call.1} parent=51 // pred_check
          %p391 = pneg %p66
        $region54: #{tpu_custom_call.1} parent=51 // pred_check_branch
          %393 = sbr.rel (%p391) target = $region56
        $region55: #{tpu_custom_call.1} parent=51 // pred_region
          %394 = dma.done %s387, 3840
        $region56: #{tpu_custom_call.1} parent=51 // pred_fallthru
          _
        %s395 = sand.u32 %s31, 1
        %s396 = scalar_lea.sflag [#allocation6], %s395
        %s397 = sand.u32 %s79, 1
        %s398 = smul.addr %s397, 240
        %s399 = scalar_lea.vmem [#allocation5], %s398
        // Predicated region
        $region57: #{tpu_custom_call.1} parent=51 // pred_check
          %p400 = pneg %p92
        $region58: #{tpu_custom_call.1} parent=51 // pred_check_branch
          %402 = sbr.rel (%p400) target = $region60
        $region59: #{tpu_custom_call.1} parent=51 // pred_region
          %403 = dma.done %s396, 3840
        $region60: #{tpu_custom_call.1} parent=51 // pred_fallthru
          _
        // Predicated region
        $region61: #{tpu_custom_call.1} parent=51 // pred_check
          %p404 = pneg %p113
        $region62: #{tpu_custom_call.1} parent=51 // pred_check_branch
          %406 = sbr.rel (%p404) target = $region64
        $region63: #{tpu_custom_call.1} parent=51 // pred_region
          %407 = dma.done [#allocation6], 32
        $region64: #{tpu_custom_call.1} parent=51 // pred_fallthru
          _
        // Predicated region
        $region65: #{tpu_custom_call.1} parent=51 // pred_check
          %p408 = pneg %p134
        $region66: #{tpu_custom_call.1} parent=51 // pred_check_branch
          %410 = sbr.rel (%p408) target = $region68
        $region67: #{tpu_custom_call.1} parent=51 // pred_region
          %411 = dma.done [#allocation9], 16
        $region68: #{tpu_custom_call.1} parent=51 // pred_fallthru
          _
        // Predicated region
        $region69: #{tpu_custom_call.1} parent=51 // pred_check
          %p412 = pneg %p155
        $region70: #{tpu_custom_call.1} parent=51 // pred_check_branch
          %414 = sbr.rel (%p412) target = $region72
        $region71: #{tpu_custom_call.1} parent=51 // pred_region
          %415 = dma.done [#allocation9], 192
        $region72: #{tpu_custom_call.1} parent=51 // pred_fallthru
          _
        // Predicated region
        $region73: #{tpu_custom_call.1} parent=51 // pred_check
          %p416 = pneg %p176
        $region74: #{tpu_custom_call.1} parent=51 // pred_check_branch
          %418 = sbr.rel (%p416) target = $region76
        $region75: #{tpu_custom_call.1} parent=51 // pred_region
          %419 = dma.done [#allocation12], 16
        $region76: #{tpu_custom_call.1} parent=51 // pred_fallthru
          _
        // Predicated region
        $region77: #{tpu_custom_call.1} parent=51 // pred_check
          %p420 = pneg %p197
        $region78: #{tpu_custom_call.1} parent=51 // pred_check_branch
          %422 = sbr.rel (%p420) target = $region80
        $region79: #{tpu_custom_call.1} parent=51 // pred_region
          %423 = dma.done [#allocation12], 192
        $region80: #{tpu_custom_call.1} parent=51 // pred_fallthru
          _
        // Predicated region
        $region81: #{tpu_custom_call.1} parent=51 // pred_check
          %p424 = pneg %p218
        $region82: #{tpu_custom_call.1} parent=51 // pred_check_branch
          %426 = sbr.rel (%p424) target = $region84
        $region83: #{tpu_custom_call.1} parent=51 // pred_region
          %427 = dma.done [#allocation15], 16
        $region84: #{tpu_custom_call.1} parent=51 // pred_fallthru
          _
        %s428 = sand.u32 %s53, 1
        %s429 = scalar_lea.sflag [#allocation3], %s428
        %s430 = sand.u32 %s53, 1
        %s431 = smul.addr %s430, 240
        %s432 = scalar_lea.vmem [#allocation2], %s431
        %p433 = pneg %p66
        %p434 = pneg %p63
        %s435 = sand.u32 %s31, 1
        %s436 = scalar_lea.sflag [#allocation6], %s435
        %s437 = sand.u32 %s79, 1
        %s438 = smul.addr %s437, 240
        %s439 = scalar_lea.vmem [#allocation5], %s438
        %p440 = pneg %p92
        %p441 = pneg %p89
        %p442 = pneg %p113
        %p443 = pneg %p110
        %p444 = pneg %p134
        %p445 = pneg %p131
        %p446 = pneg %p155
        %p447 = pneg %p152
        %p448 = pneg %p176
        %p449 = pneg %p173
        %p450 = pneg %p197
        %p451 = pneg %p194
        %p452 = pneg %p218
        %p453 = pneg %p215
        %p454 = pneg %p246
        %p455 = pneg %p243
        %s456 = sand.u32 %s233, 1
        %s457 = scalar_lea.sflag [#allocation4], %s456
        %s458 = sand.u32 %s233, 1
        %s459 = smul.addr %s458, 128
        %s460 = scalar_lea.vmem [#allocation16], %s459
        %v462 = vld [vmem:[%s390] sm:$0xff]
        %v463 = vld [vmem:[%s390 + $0x8] sm:$0xff]
        %v464 = vld [vmem:[%s390 + $0x10] sm:$0xff]
        %v465 = vld [vmem:[%s390 + $0x18] sm:$0xff]
        %v466 = vld [vmem:[%s390 + $0x20] sm:$0xff]
        %v467 = vld [vmem:[%s390 + $0x28] sm:$0xff]
        %v468 = vld [vmem:[%s390 + $0x30] sm:$0xff]
        %v469 = vld [vmem:[%s390 + $0x38] sm:$0xff]
        %v470 = vld [vmem:[%s390 + $0x40] sm:$0xff]
        %v471 = vld [vmem:[%s390 + $0x48] sm:$0xff]
        %v472 = vld [vmem:[%s390 + $0x50] sm:$0xff]
        %v473 = vld [vmem:[%s390 + $0x58] sm:$0xff]
        %v474 = vld [vmem:[%s390 + $0x60] sm:$0xff]
        %v475 = vld [vmem:[%s390 + $0x68] sm:$0xff]
        %v476 = vld [vmem:[%s390 + $0x70] sm:$0xff]
        %v477 = vld [vmem:[%s390 + $0x78] sm:$0xff]
        %v478 = vld [vmem:[%s390 + $0x80] sm:$0xff]
        %v479 = vld [vmem:[%s390 + $0x88] sm:$0xff]
        %v480 = vld [vmem:[%s390 + $0x90] sm:$0xff]
        %v481 = vld [vmem:[%s390 + $0x98] sm:$0xff]
        %v482 = vld [vmem:[%s390 + $0xa0] sm:$0xff]
        %v483 = vld [vmem:[%s390 + $0xa8] sm:$0xff]
        %v484 = vld [vmem:[%s390 + $0xb0] sm:$0xff]
        %v485 = vld [vmem:[%s390 + $0xb8] sm:$0xff]
        %v486 = vld [vmem:[%s390 + $0xc0] sm:$0xff]
        %v487 = vld [vmem:[%s390 + $0xc8] sm:$0xff]
        %v488 = vld [vmem:[%s390 + $0xd0] sm:$0xff]
        %v489 = vld [vmem:[%s390 + $0xd8] sm:$0xff]
        %v490 = vld [vmem:[%s390 + $0xe0] sm:$0xff]
        %v491 = vld [vmem:[%s390 + $0xe8] sm:$0xff]
        %v492 = vpack.c.bf16 %v463, %v462
        %v493 = vpack.c.bf16 %v465, %v464
        %v494 = vpack.c.bf16 %v467, %v466
        %v495 = vpack.c.bf16 %v469, %v468
        %v496 = vpack.c.bf16 %v471, %v470
        %v497 = vpack.c.bf16 %v473, %v472
        %v498 = vpack.c.bf16 %v475, %v474
        %v499 = vpack.c.bf16 %v477, %v476
        %v500 = vpack.c.bf16 %v479, %v478
        %v501 = vpack.c.bf16 %v481, %v480
        %v502 = vpack.c.bf16 %v483, %v482
        %v503 = vpack.c.bf16 %v485, %v484
        %v504 = vpack.c.bf16 %v487, %v486
        %v505 = vpack.c.bf16 %v489, %v488
        %v506 = vpack.c.bf16 %v491, %v490
        %v507 = vld [vmem:[#allocation7] sm:$0x3]
        %v508 = vld [vmem:[#allocation8] sm:$0x1]
        %v510 = vlaneseq
        %v511 = vshrl.u32 %v510, 7
        %v512 = vsub.s32 0, %v511
        %v513 = vrot.slane %v508, %v512
        %vm515 = vcmask 31744
        %v517 = vsel %vm515, %v492, 0
        %v520 = vsel %vm515, %v493, 0
        %v523 = vsel %vm515, %v494, 0
        %v526 = vsel %vm515, %v495, 0
        %v529 = vsel %vm515, %v496, 0
        %v532 = vsel %vm515, %v497, 0
        %v535 = vsel %vm515, %v498, 0
        %v538 = vsel %vm515, %v499, 0
        %v541 = vsel %vm515, %v500, 0
        %v544 = vsel %vm515, %v501, 0
        %v547 = vsel %vm515, %v502, 0
        %v550 = vsel %vm515, %v503, 0
        %v553 = vsel %vm515, %v504, 0
        %v556 = vsel %vm515, %v505, 0
        %v559 = vsel %vm515, %v506, 0
        %vm561 = vcmask 1041408
        %v563 = vsel %vm561, %v507, 0
        %565 = vmatprep.subr.bf16.mxu0 0
        %566 = vmatpush1.bf16.msra.mxu0 %v563
        %567 = vmatprep.subr.bf16.mxu0 0
        %568 = vmatpush1.bf16.msra.mxu0 0
        %569 = vmatprep.subr.bf16.mxu0 0
        %570 = vmatpush1.bf16.msra.mxu0 0
        %571 = vmatprep.subr.bf16.mxu0 0
        %572 = vmatpush1.bf16.msra.mxu0 0
        %573 = vmatprep.subr.bf16.mxu0 0
        %574 = vmatpush1.bf16.msra.mxu0 0
        %575 = vmatprep.subr.bf16.mxu0 0
        %576 = vmatpush1.bf16.msra.mxu0 0
        %577 = vmatprep.subr.bf16.mxu0 0
        %578 = vmatpush1.bf16.msra.mxu0 0
        %579 = vmatprep.subr.bf16.mxu0 0
        %580 = vmatpush1.bf16.msra.mxu0 0
        %581 = vmatprep.subr.bf16.mxu0 0
        %582 = vmatpush1.bf16.msra.mxu0 0
        %583 = vmatprep.subr.bf16.mxu0 0
        %584 = vmatpush1.bf16.msra.mxu0 0
        %585 = vmatprep.subr.bf16.mxu0 0
        %586 = vmatpush1.bf16.msra.mxu0 0
        %587 = vmatprep.subr.bf16.mxu0 0
        %588 = vmatpush1.bf16.msra.mxu0 0
        %589 = vmatprep.subr.bf16.mxu0 0
        %590 = vmatpush1.bf16.msra.mxu0 0
        %591 = vmatprep.subr.bf16.mxu0 0
        %592 = vmatpush1.bf16.msra.mxu0 0
        %593 = vmatprep.subr.bf16.mxu0 0
        %594 = vmatpush1.bf16.msra.mxu0 0
        %595 = vmatprep.subr.bf16.mxu0 0
        %596 = vmatpush1.bf16.msra.mxu0 0
        %597 = vmatprep.mubr.bf16.mxu0 0
        %598 = vmatmul.mubr.bf16.gmra.mrb[0].mxu0 %v517
        %v599 = vpop.f32.mrb[0].mxu0
        %v600 = vadd.f32 %v513, %v599
        %v601 = vpop.f32.mrb[0].mxu0
        %v602 = vpop.f32.mrb[0].mxu0
        %v603 = vadd.f32 %v513, %v602
        %v604 = vpop.f32.mrb[0].mxu0
        %605 = vmatprep.mubr.bf16.mxu0 0
        %606 = vmatmul.mubr.bf16.gmra.mrb[0].mxu0 %v520
        %v607 = vpop.f32.mrb[0].mxu0
        %v608 = vadd.f32 %v513, %v607
        %v609 = vpop.f32.mrb[0].mxu0
        %v610 = vpop.f32.mrb[0].mxu0
        %v611 = vadd.f32 %v513, %v610
        %v612 = vpop.f32.mrb[0].mxu0
        %613 = vmatprep.mubr.bf16.mxu0 0
        %614 = vmatmul.mubr.bf16.gmra.mrb[0].mxu0 %v523
        %v615 = vpop.f32.mrb[0].mxu0
        %v616 = vadd.f32 %v513, %v615
        %v617 = vpop.f32.mrb[0].mxu0
        %v618 = vpop.f32.mrb[0].mxu0
        %v619 = vadd.f32 %v513, %v618
        %v620 = vpop.f32.mrb[0].mxu0
        %621 = vmatprep.mubr.bf16.mxu0 0
        %622 = vmatmul.mubr.bf16.gmra.mrb[0].mxu0 %v526
        %v623 = vpop.f32.mrb[0].mxu0
        %v624 = vadd.f32 %v513, %v623
        %v625 = vpop.f32.mrb[0].mxu0
        %v626 = vpop.f32.mrb[0].mxu0
        %v627 = vadd.f32 %v513, %v626
        %v628 = vpop.f32.mrb[0].mxu0
        %629 = vmatprep.mubr.bf16.mxu0 0
        %630 = vmatmul.mubr.bf16.gmra.mrb[0].mxu0 %v529
        %v631 = vpop.f32.mrb[0].mxu0
        %v632 = vadd.f32 %v513, %v631
        %v633 = vpop.f32.mrb[0].mxu0
        %v634 = vpop.f32.mrb[0].mxu0
        %v635 = vadd.f32 %v513, %v634
        %v636 = vpop.f32.mrb[0].mxu0
        %637 = vmatprep.mubr.bf16.mxu0 0
        %638 = vmatmul.mubr.bf16.gmra.mrb[0].mxu0 %v532
        %v639 = vpop.f32.mrb[0].mxu0
        %v640 = vadd.f32 %v513, %v639
        %v641 = vpop.f32.mrb[0].mxu0
        %v642 = vpop.f32.mrb[0].mxu0
        %v643 = vadd.f32 %v513, %v642
        %v644 = vpop.f32.mrb[0].mxu0
        %645 = vmatprep.mubr.bf16.mxu0 0
        %646 = vmatmul.mubr.bf16.gmra.mrb[0].mxu0 %v535
        %v647 = vpop.f32.mrb[0].mxu0
        %v648 = vadd.f32 %v513, %v647
        %v649 = vpop.f32.mrb[0].mxu0
        %v650 = vpop.f32.mrb[0].mxu0
        %v651 = vadd.f32 %v513, %v650
        %v652 = vpop.f32.mrb[0].mxu0
        %653 = vmatprep.mubr.bf16.mxu0 0
        %654 = vmatmul.mubr.bf16.gmra.mrb[0].mxu0 %v538
        %v655 = vpop.f32.mrb[0].mxu0
        %v656 = vadd.f32 %v513, %v655
        %v657 = vpop.f32.mrb[0].mxu0
        %v658 = vpop.f32.mrb[0].mxu0
        %v659 = vadd.f32 %v513, %v658
        %v660 = vpop.f32.mrb[0].mxu0
        %661 = vmatprep.mubr.bf16.mxu0 0
        %662 = vmatmul.mubr.bf16.gmra.mrb[0].mxu0 %v541
        %v663 = vpop.f32.mrb[0].mxu0
        %v664 = vadd.f32 %v513, %v663
        %v665 = vpop.f32.mrb[0].mxu0
        %v666 = vpop.f32.mrb[0].mxu0
        %v667 = vadd.f32 %v513, %v666
        %v668 = vpop.f32.mrb[0].mxu0
        %669 = vmatprep.mubr.bf16.mxu0 0
        %670 = vmatmul.mubr.bf16.gmra.mrb[0].mxu0 %v544
        %v671 = vpop.f32.mrb[0].mxu0
        %v672 = vadd.f32 %v513, %v671
        %v673 = vpop.f32.mrb[0].mxu0
        %v674 = vpop.f32.mrb[0].mxu0
        %v675 = vadd.f32 %v513, %v674
        %v676 = vpop.f32.mrb[0].mxu0
        %677 = vmatprep.mubr.bf16.mxu0 0
        %678 = vmatmul.mubr.bf16.gmra.mrb[0].mxu0 %v547
        %v679 = vpop.f32.mrb[0].mxu0
        %v680 = vadd.f32 %v513, %v679
        %v681 = vpop.f32.mrb[0].mxu0
        %v682 = vpop.f32.mrb[0].mxu0
        %v683 = vadd.f32 %v513, %v682
        %v684 = vpop.f32.mrb[0].mxu0
        %685 = vmatprep.mubr.bf16.mxu0 0
        %686 = vmatmul.mubr.bf16.gmra.mrb[0].mxu0 %v550
        %v687 = vpop.f32.mrb[0].mxu0
        %v688 = vadd.f32 %v513, %v687
        %v689 = vpop.f32.mrb[0].mxu0
        %v690 = vpop.f32.mrb[0].mxu0
        %v691 = vadd.f32 %v513, %v690
        %v692 = vpop.f32.mrb[0].mxu0
        %693 = vmatprep.mubr.bf16.mxu0 0
        %694 = vmatmul.mubr.bf16.gmra.mrb[0].mxu0 %v553
        %v695 = vpop.f32.mrb[0].mxu0
        %v696 = vadd.f32 %v513, %v695
        %v697 = vpop.f32.mrb[0].mxu0
        %v698 = vpop.f32.mrb[0].mxu0
        %v699 = vadd.f32 %v513, %v698
        %v700 = vpop.f32.mrb[0].mxu0
        %701 = vmatprep.mubr.bf16.mxu0 0
        %702 = vmatmul.mubr.bf16.gmra.mrb[0].mxu0 %v556
        %v703 = vpop.f32.mrb[0].mxu0
        %v704 = vadd.f32 %v513, %v703
        %v705 = vpop.f32.mrb[0].mxu0
        %v706 = vpop.f32.mrb[0].mxu0
        %v707 = vadd.f32 %v513, %v706
        %v708 = vpop.f32.mrb[0].mxu0
        %709 = vmatprep.mubr.bf16.mxu0 0
        %710 = vmatmul.mubr.bf16.gmra.mrb[0].mxu0 %v559
        %v711 = vpop.f32.mrb[0].mxu0
        %v712 = vadd.f32 %v513, %v711
        %v713 = vpop.f32.mrb[0].mxu0
        %v714 = vpop.f32.mrb[0].mxu0
        %v715 = vadd.f32 %v513, %v714
        %v716 = vpop.f32.mrb[0].mxu0
        %717 = vdwg.mxu0
        %v718 = vmax.f32 %v600, 0.0
        %v719 = vmax.f32 %v603, 0.0
        %v720 = vmax.f32 %v608, 0.0
        %v721 = vmax.f32 %v611, 0.0
        %v722 = vmax.f32 %v616, 0.0
        %v723 = vmax.f32 %v619, 0.0
        %v724 = vmax.f32 %v624, 0.0
        %v725 = vmax.f32 %v627, 0.0
        %v726 = vmax.f32 %v632, 0.0
        %v727 = vmax.f32 %v635, 0.0
        %v728 = vmax.f32 %v640, 0.0
        %v729 = vmax.f32 %v643, 0.0
        %v730 = vmax.f32 %v648, 0.0
        %v731 = vmax.f32 %v651, 0.0
        %v732 = vmax.f32 %v656, 0.0
        %v733 = vmax.f32 %v659, 0.0
        %v734 = vmax.f32 %v664, 0.0
        %v735 = vmax.f32 %v667, 0.0
        %v736 = vmax.f32 %v672, 0.0
        %v737 = vmax.f32 %v675, 0.0
        %v738 = vmax.f32 %v680, 0.0
        %v739 = vmax.f32 %v683, 0.0
        %v740 = vmax.f32 %v688, 0.0
        %v741 = vmax.f32 %v691, 0.0
        %v742 = vmax.f32 %v696, 0.0
        %v743 = vmax.f32 %v699, 0.0
        %v744 = vmax.f32 %v704, 0.0
        %v745 = vmax.f32 %v707, 0.0
        %v746 = vmax.f32 %v712, 0.0
        %v747 = vmax.f32 %v715, 0.0
        %v748 = vmin.f32 %v718, 6.0
        %v749 = vmin.f32 %v719, 6.0
        %v750 = vmin.f32 %v720, 6.0
        %v751 = vmin.f32 %v721, 6.0
        %v752 = vmin.f32 %v722, 6.0
        %v753 = vmin.f32 %v723, 6.0
        %v754 = vmin.f32 %v724, 6.0
        %v755 = vmin.f32 %v725, 6.0
        %v756 = vmin.f32 %v726, 6.0
        %v757 = vmin.f32 %v727, 6.0
        %v758 = vmin.f32 %v728, 6.0
        %v759 = vmin.f32 %v729, 6.0
        %v760 = vmin.f32 %v730, 6.0
        %v761 = vmin.f32 %v731, 6.0
        %v762 = vmin.f32 %v732, 6.0
        %v763 = vmin.f32 %v733, 6.0
        %v764 = vmin.f32 %v734, 6.0
        %v765 = vmin.f32 %v735, 6.0
        %v766 = vmin.f32 %v736, 6.0
        %v767 = vmin.f32 %v737, 6.0
        %v768 = vmin.f32 %v738, 6.0
        %v769 = vmin.f32 %v739, 6.0
        %v770 = vmin.f32 %v740, 6.0
        %v771 = vmin.f32 %v741, 6.0
        %v772 = vmin.f32 %v742, 6.0
        %v773 = vmin.f32 %v743, 6.0
        %v774 = vmin.f32 %v744, 6.0
        %v775 = vmin.f32 %v745, 6.0
        %v776 = vmin.f32 %v746, 6.0
        %v777 = vmin.f32 %v747, 6.0
        %v778 = vld [vmem:[%s399] sm:$0xff]
        %v779 = vld [vmem:[%s399 + $0x8] sm:$0xff]
        %v780 = vld [vmem:[%s399 + $0x10] sm:$0xff]
        %v781 = vld [vmem:[%s399 + $0x18] sm:$0xff]
        %v782 = vld [vmem:[%s399 + $0x20] sm:$0xff]
        %v783 = vld [vmem:[%s399 + $0x28] sm:$0xff]
        %v784 = vld [vmem:[%s399 + $0x30] sm:$0xff]
        %v785 = vld [vmem:[%s399 + $0x38] sm:$0xff]
        %v786 = vld [vmem:[%s399 + $0x40] sm:$0xff]
        %v787 = vld [vmem:[%s399 + $0x48] sm:$0xff]
        %v788 = vld [vmem:[%s399 + $0x50] sm:$0xff]
        %v789 = vld [vmem:[%s399 + $0x58] sm:$0xff]
        %v790 = vld [vmem:[%s399 + $0x60] sm:$0xff]
        %v791 = vld [vmem:[%s399 + $0x68] sm:$0xff]
        %v792 = vld [vmem:[%s399 + $0x70] sm:$0xff]
        %v793 = vld [vmem:[%s399 + $0x78] sm:$0xff]
        %v794 = vld [vmem:[%s399 + $0x80] sm:$0xff]
        %v795 = vld [vmem:[%s399 + $0x88] sm:$0xff]
        %v796 = vld [vmem:[%s399 + $0x90] sm:$0xff]
        %v797 = vld [vmem:[%s399 + $0x98] sm:$0xff]
        %v798 = vld [vmem:[%s399 + $0xa0] sm:$0xff]
        %v799 = vld [vmem:[%s399 + $0xa8] sm:$0xff]
        %v800 = vld [vmem:[%s399 + $0xb0] sm:$0xff]
        %v801 = vld [vmem:[%s399 + $0xb8] sm:$0xff]
        %v802 = vld [vmem:[%s399 + $0xc0] sm:$0xff]
        %v803 = vld [vmem:[%s399 + $0xc8] sm:$0xff]
        %v804 = vld [vmem:[%s399 + $0xd0] sm:$0xff]
        %v805 = vld [vmem:[%s399 + $0xd8] sm:$0xff]
        %v806 = vld [vmem:[%s399 + $0xe0] sm:$0xff]
        %v807 = vld [vmem:[%s399 + $0xe8] sm:$0xff]
        %809 = vset.pattern.permute.xlu0 0
        %810 = vperm.xlu0 %809, %v778
        %v811 = vpop.permute.xlu0 %810
        %814 = vset.pattern.permute.xlu0 0
        %815 = vperm.xlu0 %814, %v779
        %v816 = vpop.permute.xlu0 %815
        %819 = vset.pattern.permute.xlu0 0
        %820 = vperm.xlu0 %819, %v780
        %v821 = vpop.permute.xlu0 %820
        %824 = vset.pattern.permute.xlu0 0
        %825 = vperm.xlu0 %824, %v781
        %v826 = vpop.permute.xlu0 %825
        %829 = vset.pattern.permute.xlu0 0
        %830 = vperm.xlu0 %829, %v782
        %v831 = vpop.permute.xlu0 %830
        %834 = vset.pattern.permute.xlu0 0
        %835 = vperm.xlu0 %834, %v783
        %v836 = vpop.permute.xlu0 %835
        %839 = vset.pattern.permute.xlu0 0
        %840 = vperm.xlu0 %839, %v784
        %v841 = vpop.permute.xlu0 %840
        %844 = vset.pattern.permute.xlu0 0
        %845 = vperm.xlu0 %844, %v785
        %v846 = vpop.permute.xlu0 %845
        %849 = vset.pattern.permute.xlu0 0
        %850 = vperm.xlu0 %849, %v786
        %v851 = vpop.permute.xlu0 %850
        %854 = vset.pattern.permute.xlu0 0
        %855 = vperm.xlu0 %854, %v787
        %v856 = vpop.permute.xlu0 %855
        %859 = vset.pattern.permute.xlu0 0
        %860 = vperm.xlu0 %859, %v788
        %v861 = vpop.permute.xlu0 %860
        %864 = vset.pattern.permute.xlu0 0
        %865 = vperm.xlu0 %864, %v789
        %v866 = vpop.permute.xlu0 %865
        %869 = vset.pattern.permute.xlu0 0
        %870 = vperm.xlu0 %869, %v790
        %v871 = vpop.permute.xlu0 %870
        %874 = vset.pattern.permute.xlu0 0
        %875 = vperm.xlu0 %874, %v791
        %v876 = vpop.permute.xlu0 %875
        %879 = vset.pattern.permute.xlu0 0
        %880 = vperm.xlu0 %879, %v792
        %v881 = vpop.permute.xlu0 %880
        %884 = vset.pattern.permute.xlu0 0
        %885 = vperm.xlu0 %884, %v793
        %v886 = vpop.permute.xlu0 %885
        %889 = vset.pattern.permute.xlu0 0
        %890 = vperm.xlu0 %889, %v794
        %v891 = vpop.permute.xlu0 %890
        %894 = vset.pattern.permute.xlu0 0
        %895 = vperm.xlu0 %894, %v795
        %v896 = vpop.permute.xlu0 %895
        %899 = vset.pattern.permute.xlu0 0
        %900 = vperm.xlu0 %899, %v796
        %v901 = vpop.permute.xlu0 %900
        %904 = vset.pattern.permute.xlu0 0
        %905 = vperm.xlu0 %904, %v797
        %v906 = vpop.permute.xlu0 %905
        %909 = vset.pattern.permute.xlu0 0
        %910 = vperm.xlu0 %909, %v798
        %v911 = vpop.permute.xlu0 %910
        %914 = vset.pattern.permute.xlu0 0
        %915 = vperm.xlu0 %914, %v799
        %v916 = vpop.permute.xlu0 %915
        %919 = vset.pattern.permute.xlu0 0
        %920 = vperm.xlu0 %919, %v800
        %v921 = vpop.permute.xlu0 %920
        %924 = vset.pattern.permute.xlu0 0
        %925 = vperm.xlu0 %924, %v801
        %v926 = vpop.permute.xlu0 %925
        %929 = vset.pattern.permute.xlu0 0
        %930 = vperm.xlu0 %929, %v802
        %v931 = vpop.permute.xlu0 %930
        %934 = vset.pattern.permute.xlu0 0
        %935 = vperm.xlu0 %934, %v803
        %v936 = vpop.permute.xlu0 %935
        %939 = vset.pattern.permute.xlu0 0
        %940 = vperm.xlu0 %939, %v804
        %v941 = vpop.permute.xlu0 %940
        %944 = vset.pattern.permute.xlu0 0
        %945 = vperm.xlu0 %944, %v805
        %v946 = vpop.permute.xlu0 %945
        %949 = vset.pattern.permute.xlu0 0
        %950 = vperm.xlu0 %949, %v806
        %v951 = vpop.permute.xlu0 %950
        %954 = vset.pattern.permute.xlu0 0
        %955 = vperm.xlu0 %954, %v807
        %v956 = vpop.permute.xlu0 %955
        %v958 = vmul.f32 %v748, %v811
        %v959 = vmul.f32 %v749, %v816
        %v960 = vmul.f32 %v750, %v821
        %v961 = vmul.f32 %v751, %v826
        %v962 = vmul.f32 %v752, %v831
        %v963 = vmul.f32 %v753, %v836
        %v964 = vmul.f32 %v754, %v841
        %v965 = vmul.f32 %v755, %v846
        %v966 = vmul.f32 %v756, %v851
        %v967 = vmul.f32 %v757, %v856
        %v968 = vmul.f32 %v758, %v861
        %v969 = vmul.f32 %v759, %v866
        %v970 = vmul.f32 %v760, %v871
        %v971 = vmul.f32 %v761, %v876
        %v972 = vmul.f32 %v762, %v881
        %v973 = vmul.f32 %v763, %v886
        %v974 = vmul.f32 %v764, %v891
        %v975 = vmul.f32 %v765, %v896
        %v976 = vmul.f32 %v766, %v901
        %v977 = vmul.f32 %v767, %v906
        %v978 = vmul.f32 %v768, %v911
        %v979 = vmul.f32 %v769, %v916
        %v980 = vmul.f32 %v770, %v921
        %v981 = vmul.f32 %v771, %v926
        %v982 = vmul.f32 %v772, %v931
        %v983 = vmul.f32 %v773, %v936
        %v984 = vmul.f32 %v774, %v941
        %v985 = vmul.f32 %v775, %v946
        %v986 = vmul.f32 %v776, %v951
        %v987 = vmul.f32 %v777, %v956
        %v988 = vld [vmem:[#allocation10] sm:$0x1]
        %v989 = vlaneseq
        %v990 = vshrl.u32 %v989, 7
        %v991 = vsub.s32 0, %v990
        %v992 = vrot.slane %v988, %v991
        %v993 = vmul.f32 %v958, %v992
        %v994 = vmul.f32 %v959, %v992
        %v995 = vmul.f32 %v961, %v992
        %v996 = vmul.f32 %v962, %v992
        %v997 = vmul.f32 %v964, %v992
        %v998 = vmul.f32 %v965, %v992
        %v999 = vmul.f32 %v967, %v992
        %v1000 = vmul.f32 %v968, %v992
        %v1001 = vmul.f32 %v970, %v992
        %v1002 = vmul.f32 %v971, %v992
        %v1003 = vmul.f32 %v973, %v992
        %v1004 = vmul.f32 %v974, %v992
        %v1005 = vmul.f32 %v976, %v992
        %v1006 = vmul.f32 %v977, %v992
        %v1007 = vmul.f32 %v979, %v992
        %v1008 = vmul.f32 %v980, %v992
        %v1009 = vadd.f32 %v993, 0.0
        %v1010 = vadd.f32 %v994, 0.0
        %v1011 = vadd.f32 %v995, 0.0
        %v1012 = vadd.f32 %v996, 0.0
        %v1013 = vadd.f32 %v997, 0.0
        %v1014 = vadd.f32 %v998, 0.0
        %v1015 = vadd.f32 %v999, 0.0
        %v1016 = vadd.f32 %v1000, 0.0
        %v1017 = vadd.f32 %v1001, 0.0
        %v1018 = vadd.f32 %v1002, 0.0
        %v1019 = vadd.f32 %v1003, 0.0
        %v1020 = vadd.f32 %v1004, 0.0
        %v1021 = vadd.f32 %v1005, 0.0
        %v1022 = vadd.f32 %v1006, 0.0
        %v1023 = vadd.f32 %v1007, 0.0
        %v1024 = vadd.f32 %v1008, 0.0
        %v1025 = vld [vmem:[#allocation10 + $0x1] sm:$0x1]
        %v1026 = vlaneseq
        %v1027 = vshrl.u32 %v1026, 7
        %v1028 = vsub.s32 0, %v1027
        %v1029 = vrot.slane %v1025, %v1028
        %v1030 = vmul.f32 %v958, %v1029
        %v1031 = vmul.f32 %v959, %v1029
        %v1032 = vmul.f32 %v960, %v1029
        %v1033 = vmul.f32 %v961, %v1029
        %v1034 = vmul.f32 %v962, %v1029
        %v1035 = vmul.f32 %v963, %v1029
        %v1036 = vmul.f32 %v964, %v1029
        %v1037 = vmul.f32 %v965, %v1029
        %v1038 = vmul.f32 %v966, %v1029
        %v1039 = vmul.f32 %v967, %v1029
        %v1040 = vmul.f32 %v968, %v1029
        %v1041 = vmul.f32 %v969, %v1029
        %v1042 = vmul.f32 %v970, %v1029
        %v1043 = vmul.f32 %v971, %v1029
        %v1044 = vmul.f32 %v972, %v1029
        %v1045 = vmul.f32 %v973, %v1029
        %v1046 = vmul.f32 %v974, %v1029
        %v1047 = vmul.f32 %v975, %v1029
        %v1048 = vmul.f32 %v976, %v1029
        %v1049 = vmul.f32 %v977, %v1029
        %v1050 = vmul.f32 %v978, %v1029
        %v1051 = vmul.f32 %v979, %v1029
        %v1052 = vmul.f32 %v980, %v1029
        %v1053 = vmul.f32 %v981, %v1029
        %vm1078 = vcmask 1046528
        %v1079 = vrot.slane %v1030, 1
        %v1080 = vrot.slane %v1031, 1
        %v1081 = vsel %vm1078, %v1079, %v1080
        %v1082 = vrot.slane %v1032, 1
        %v1083 = vsel %vm1078, %v1080, %v1082
        %v1084 = vrot.slane %v1033, 1
        %v1085 = vrot.slane %v1034, 1
        %v1086 = vsel %vm1078, %v1084, %v1085
        %v1087 = vrot.slane %v1035, 1
        %v1088 = vsel %vm1078, %v1085, %v1087
        %v1089 = vrot.slane %v1036, 1
        %v1090 = vrot.slane %v1037, 1
        %v1091 = vsel %vm1078, %v1089, %v1090
        %v1092 = vrot.slane %v1038, 1
        %v1093 = vsel %vm1078, %v1090, %v1092
        %v1094 = vrot.slane %v1039, 1
        %v1095 = vrot.slane %v1040, 1
        %v1096 = vsel %vm1078, %v1094, %v1095
        %v1097 = vrot.slane %v1041, 1
        %v1098 = vsel %vm1078, %v1095, %v1097
        %v1099 = vrot.slane %v1042, 1
        %v1100 = vrot.slane %v1043, 1
        %v1101 = vsel %vm1078, %v1099, %v1100
        %v1102 = vrot.slane %v1044, 1
        %v1103 = vsel %vm1078, %v1100, %v1102
        %v1104 = vrot.slane %v1045, 1
        %v1105 = vrot.slane %v1046, 1
        %v1106 = vsel %vm1078, %v1104, %v1105
        %v1107 = vrot.slane %v1047, 1
        %v1108 = vsel %vm1078, %v1105, %v1107
        %v1109 = vrot.slane %v1048, 1
        %v1110 = vrot.slane %v1049, 1
        %v1111 = vsel %vm1078, %v1109, %v1110
        %v1112 = vrot.slane %v1050, 1
        %v1113 = vsel %vm1078, %v1110, %v1112
        %v1114 = vrot.slane %v1051, 1
        %v1115 = vrot.slane %v1052, 1
        %v1116 = vsel %vm1078, %v1114, %v1115
        %v1117 = vrot.slane %v1053, 1
        %v1118 = vsel %vm1078, %v1115, %v1117
        %v1135 = vadd.f32 %v1009, %v1081
        %v1136 = vadd.f32 %v1010, %v1083
        %v1137 = vadd.f32 %v1011, %v1086
        %v1138 = vadd.f32 %v1012, %v1088
        %v1139 = vadd.f32 %v1013, %v1091
        %v1140 = vadd.f32 %v1014, %v1093
        %v1141 = vadd.f32 %v1015, %v1096
        %v1142 = vadd.f32 %v1016, %v1098
        %v1143 = vadd.f32 %v1017, %v1101
        %v1144 = vadd.f32 %v1018, %v1103
        %v1145 = vadd.f32 %v1019, %v1106
        %v1146 = vadd.f32 %v1020, %v1108
        %v1147 = vadd.f32 %v1021, %v1111
        %v1148 = vadd.f32 %v1022, %v1113
        %v1149 = vadd.f32 %v1023, %v1116
        %v1150 = vadd.f32 %v1024, %v1118
        %v1151 = vld [vmem:[#allocation10 + $0x2] sm:$0x1]
        %v1152 = vlaneseq
        %v1153 = vshrl.u32 %v1152, 7
        %v1154 = vsub.s32 0, %v1153
        %v1155 = vrot.slane %v1151, %v1154
        %v1156 = vmul.f32 %v958, %v1155
        %v1157 = vmul.f32 %v959, %v1155
        %v1158 = vmul.f32 %v960, %v1155
        %v1159 = vmul.f32 %v961, %v1155
        %v1160 = vmul.f32 %v962, %v1155
        %v1161 = vmul.f32 %v963, %v1155
        %v1162 = vmul.f32 %v964, %v1155
        %v1163 = vmul.f32 %v965, %v1155
        %v1164 = vmul.f32 %v966, %v1155
        %v1165 = vmul.f32 %v967, %v1155
        %v1166 = vmul.f32 %v968, %v1155
        %v1167 = vmul.f32 %v969, %v1155
        %v1168 = vmul.f32 %v970, %v1155
        %v1169 = vmul.f32 %v971, %v1155
        %v1170 = vmul.f32 %v972, %v1155
        %v1171 = vmul.f32 %v973, %v1155
        %v1172 = vmul.f32 %v974, %v1155
        %v1173 = vmul.f32 %v975, %v1155
        %v1174 = vmul.f32 %v976, %v1155
        %v1175 = vmul.f32 %v977, %v1155
        %v1176 = vmul.f32 %v978, %v1155
        %v1177 = vmul.f32 %v979, %v1155
        %v1178 = vmul.f32 %v980, %v1155
        %v1179 = vmul.f32 %v981, %v1155
        %vm1204 = vcmask 1045504
        %v1205 = vrot.slane %v1156, 2
        %v1206 = vrot.slane %v1157, 2
        %v1207 = vsel %vm1204, %v1205, %v1206
        %v1208 = vrot.slane %v1158, 2
        %v1209 = vsel %vm1204, %v1206, %v1208
        %v1210 = vrot.slane %v1159, 2
        %v1211 = vrot.slane %v1160, 2
        %v1212 = vsel %vm1204, %v1210, %v1211
        %v1213 = vrot.slane %v1161, 2
        %v1214 = vsel %vm1204, %v1211, %v1213
        %v1215 = vrot.slane %v1162, 2
        %v1216 = vrot.slane %v1163, 2
        %v1217 = vsel %vm1204, %v1215, %v1216
        %v1218 = vrot.slane %v1164, 2
        %v1219 = vsel %vm1204, %v1216, %v1218
        %v1220 = vrot.slane %v1165, 2
        %v1221 = vrot.slane %v1166, 2
        %v1222 = vsel %vm1204, %v1220, %v1221
        %v1223 = vrot.slane %v1167, 2
        %v1224 = vsel %vm1204, %v1221, %v1223
        %v1225 = vrot.slane %v1168, 2
        %v1226 = vrot.slane %v1169, 2
        %v1227 = vsel %vm1204, %v1225, %v1226
        %v1228 = vrot.slane %v1170, 2
        %v1229 = vsel %vm1204, %v1226, %v1228
        %v1230 = vrot.slane %v1171, 2
        %v1231 = vrot.slane %v1172, 2
        %v1232 = vsel %vm1204, %v1230, %v1231
        %v1233 = vrot.slane %v1173, 2
        %v1234 = vsel %vm1204, %v1231, %v1233
        %v1235 = vrot.slane %v1174, 2
        %v1236 = vrot.slane %v1175, 2
        %v1237 = vsel %vm1204, %v1235, %v1236
        %v1238 = vrot.slane %v1176, 2
        %v1239 = vsel %vm1204, %v1236, %v1238
        %v1240 = vrot.slane %v1177, 2
        %v1241 = vrot.slane %v1178, 2
        %v1242 = vsel %vm1204, %v1240, %v1241
        %v1243 = vrot.slane %v1179, 2
        %v1244 = vsel %vm1204, %v1241, %v1243
        %v1261 = vadd.f32 %v1135, %v1207
        %v1262 = vadd.f32 %v1136, %v1209
        %v1263 = vadd.f32 %v1137, %v1212
        %v1264 = vadd.f32 %v1138, %v1214
        %v1265 = vadd.f32 %v1139, %v1217
        %v1266 = vadd.f32 %v1140, %v1219
        %v1267 = vadd.f32 %v1141, %v1222
        %v1268 = vadd.f32 %v1142, %v1224
        %v1269 = vadd.f32 %v1143, %v1227
        %v1270 = vadd.f32 %v1144, %v1229
        %v1271 = vadd.f32 %v1145, %v1232
        %v1272 = vadd.f32 %v1146, %v1234
        %v1273 = vadd.f32 %v1147, %v1237
        %v1274 = vadd.f32 %v1148, %v1239
        %v1275 = vadd.f32 %v1149, %v1242
        %v1276 = vadd.f32 %v1150, %v1244
        %s1277 = scalar_lea.vmem [#allocation10], 4
        %v1278 = vld [vmem:[%s1277] sm:$0x1]
        %v1279 = vlaneseq
        %v1280 = vshrl.u32 %v1279, 7
        %v1281 = vsub.s32 0, %v1280
        %v1282 = vrot.slane %v1278, %v1281
        %v1283 = vmul.f32 %v961, %v1282
        %v1284 = vmul.f32 %v962, %v1282
        %v1285 = vmul.f32 %v964, %v1282
        %v1286 = vmul.f32 %v965, %v1282
        %v1287 = vmul.f32 %v967, %v1282
        %v1288 = vmul.f32 %v968, %v1282
        %v1289 = vmul.f32 %v970, %v1282
        %v1290 = vmul.f32 %v971, %v1282
        %v1291 = vmul.f32 %v973, %v1282
        %v1292 = vmul.f32 %v974, %v1282
        %v1293 = vmul.f32 %v976, %v1282
        %v1294 = vmul.f32 %v977, %v1282
        %v1295 = vmul.f32 %v979, %v1282
        %v1296 = vmul.f32 %v980, %v1282
        %v1297 = vmul.f32 %v982, %v1282
        %v1298 = vmul.f32 %v983, %v1282
        %v1299 = vadd.f32 %v1261, %v1283
        %v1300 = vadd.f32 %v1262, %v1284
        %v1301 = vadd.f32 %v1263, %v1285
        %v1302 = vadd.f32 %v1264, %v1286
        %v1303 = vadd.f32 %v1265, %v1287
        %v1304 = vadd.f32 %v1266, %v1288
        %v1305 = vadd.f32 %v1267, %v1289
        %v1306 = vadd.f32 %v1268, %v1290
        %v1307 = vadd.f32 %v1269, %v1291
        %v1308 = vadd.f32 %v1270, %v1292
        %v1309 = vadd.f32 %v1271, %v1293
        %v1310 = vadd.f32 %v1272, %v1294
        %v1311 = vadd.f32 %v1273, %v1295
        %v1312 = vadd.f32 %v1274, %v1296
        %v1313 = vadd.f32 %v1275, %v1297
        %v1314 = vadd.f32 %v1276, %v1298
        %v1315 = vld [vmem:[%s1277 + $0x1] sm:$0x1]
        %v1316 = vlaneseq
        %v1317 = vshrl.u32 %v1316, 7
        %v1318 = vsub.s32 0, %v1317
        %v1319 = vrot.slane %v1315, %v1318
        %v1320 = vmul.f32 %v961, %v1319
        %v1321 = vmul.f32 %v962, %v1319
        %v1322 = vmul.f32 %v963, %v1319
        %v1323 = vmul.f32 %v964, %v1319
        %v1324 = vmul.f32 %v965, %v1319
        %v1325 = vmul.f32 %v966, %v1319
        %v1326 = vmul.f32 %v967, %v1319
        %v1327 = vmul.f32 %v968, %v1319
        %v1328 = vmul.f32 %v969, %v1319
        %v1329 = vmul.f32 %v970, %v1319
        %v1330 = vmul.f32 %v971, %v1319
        %v1331 = vmul.f32 %v972, %v1319
        %v1332 = vmul.f32 %v973, %v1319
        %v1333 = vmul.f32 %v974, %v1319
        %v1334 = vmul.f32 %v975, %v1319
        %v1335 = vmul.f32 %v976, %v1319
        %v1336 = vmul.f32 %v977, %v1319
        %v1337 = vmul.f32 %v978, %v1319
        %v1338 = vmul.f32 %v979, %v1319
        %v1339 = vmul.f32 %v980, %v1319
        %v1340 = vmul.f32 %v981, %v1319
        %v1341 = vmul.f32 %v982, %v1319
        %v1342 = vmul.f32 %v983, %v1319
        %v1343 = vmul.f32 %v984, %v1319
        %v1368 = vrot.slane %v1320, 1
        %v1369 = vrot.slane %v1321, 1
        %v1370 = vsel %vm1078, %v1368, %v1369
        %v1371 = vrot.slane %v1322, 1
        %v1372 = vsel %vm1078, %v1369, %v1371
        %v1373 = vrot.slane %v1323, 1
        %v1374 = vrot.slane %v1324, 1
        %v1375 = vsel %vm1078, %v1373, %v1374
        %v1376 = vrot.slane %v1325, 1
        %v1377 = vsel %vm1078, %v1374, %v1376
        %v1378 = vrot.slane %v1326, 1
        %v1379 = vrot.slane %v1327, 1
        %v1380 = vsel %vm1078, %v1378, %v1379
        %v1381 = vrot.slane %v1328, 1
        %v1382 = vsel %vm1078, %v1379, %v1381
        %v1383 = vrot.slane %v1329, 1
        %v1384 = vrot.slane %v1330, 1
        %v1385 = vsel %vm1078, %v1383, %v1384
        %v1386 = vrot.slane %v1331, 1
        %v1387 = vsel %vm1078, %v1384, %v1386
        %v1388 = vrot.slane %v1332, 1
        %v1389 = vrot.slane %v1333, 1
        %v1390 = vsel %vm1078, %v1388, %v1389
        %v1391 = vrot.slane %v1334, 1
        %v1392 = vsel %vm1078, %v1389, %v1391
        %v1393 = vrot.slane %v1335, 1
        %v1394 = vrot.slane %v1336, 1
        %v1395 = vsel %vm1078, %v1393, %v1394
        %v1396 = vrot.slane %v1337, 1
        %v1397 = vsel %vm1078, %v1394, %v1396
        %v1398 = vrot.slane %v1338, 1
        %v1399 = vrot.slane %v1339, 1
        %v1400 = vsel %vm1078, %v1398, %v1399
        %v1401 = vrot.slane %v1340, 1
        %v1402 = vsel %vm1078, %v1399, %v1401
        %v1403 = vrot.slane %v1341, 1
        %v1404 = vrot.slane %v1342, 1
        %v1405 = vsel %vm1078, %v1403, %v1404
        %v1406 = vrot.slane %v1343, 1
        %v1407 = vsel %vm1078, %v1404, %v1406
        %v1424 = vadd.f32 %v1299, %v1370
        %v1425 = vadd.f32 %v1300, %v1372
        %v1426 = vadd.f32 %v1301, %v1375
        %v1427 = vadd.f32 %v1302, %v1377
        %v1428 = vadd.f32 %v1303, %v1380
        %v1429 = vadd.f32 %v1304, %v1382
        %v1430 = vadd.f32 %v1305, %v1385
        %v1431 = vadd.f32 %v1306, %v1387
        %v1432 = vadd.f32 %v1307, %v1390
        %v1433 = vadd.f32 %v1308, %v1392
        %v1434 = vadd.f32 %v1309, %v1395
        %v1435 = vadd.f32 %v1310, %v1397
        %v1436 = vadd.f32 %v1311, %v1400
        %v1437 = vadd.f32 %v1312, %v1402
        %v1438 = vadd.f32 %v1313, %v1405
        %v1439 = vadd.f32 %v1314, %v1407
        %v1440 = vld [vmem:[%s1277 + $0x2] sm:$0x1]
        %v1441 = vlaneseq
        %v1442 = vshrl.u32 %v1441, 7
        %v1443 = vsub.s32 0, %v1442
        %v1444 = vrot.slane %v1440, %v1443
        %v1445 = vmul.f32 %v961, %v1444
        %v1446 = vmul.f32 %v962, %v1444
        %v1447 = vmul.f32 %v963, %v1444
        %v1448 = vmul.f32 %v964, %v1444
        %v1449 = vmul.f32 %v965, %v1444
        %v1450 = vmul.f32 %v966, %v1444
        %v1451 = vmul.f32 %v967, %v1444
        %v1452 = vmul.f32 %v968, %v1444
        %v1453 = vmul.f32 %v969, %v1444
        %v1454 = vmul.f32 %v970, %v1444
        %v1455 = vmul.f32 %v971, %v1444
        %v1456 = vmul.f32 %v972, %v1444
        %v1457 = vmul.f32 %v973, %v1444
        %v1458 = vmul.f32 %v974, %v1444
        %v1459 = vmul.f32 %v975, %v1444
        %v1460 = vmul.f32 %v976, %v1444
        %v1461 = vmul.f32 %v977, %v1444
        %v1462 = vmul.f32 %v978, %v1444
        %v1463 = vmul.f32 %v979, %v1444
        %v1464 = vmul.f32 %v980, %v1444
        %v1465 = vmul.f32 %v981, %v1444
        %v1466 = vmul.f32 %v982, %v1444
        %v1467 = vmul.f32 %v983, %v1444
        %v1468 = vmul.f32 %v984, %v1444
        %v1493 = vrot.slane %v1445, 2
        %v1494 = vrot.slane %v1446, 2
        %v1495 = vsel %vm1204, %v1493, %v1494
        %v1496 = vrot.slane %v1447, 2
        %v1497 = vsel %vm1204, %v1494, %v1496
        %v1498 = vrot.slane %v1448, 2
        %v1499 = vrot.slane %v1449, 2
        %v1500 = vsel %vm1204, %v1498, %v1499
        %v1501 = vrot.slane %v1450, 2
        %v1502 = vsel %vm1204, %v1499, %v1501
        %v1503 = vrot.slane %v1451, 2
        %v1504 = vrot.slane %v1452, 2
        %v1505 = vsel %vm1204, %v1503, %v1504
        %v1506 = vrot.slane %v1453, 2
        %v1507 = vsel %vm1204, %v1504, %v1506
        %v1508 = vrot.slane %v1454, 2
        %v1509 = vrot.slane %v1455, 2
        %v1510 = vsel %vm1204, %v1508, %v1509
        %v1511 = vrot.slane %v1456, 2
        %v1512 = vsel %vm1204, %v1509, %v1511
        %v1513 = vrot.slane %v1457, 2
        %v1514 = vrot.slane %v1458, 2
        %v1515 = vsel %vm1204, %v1513, %v1514
        %v1516 = vrot.slane %v1459, 2
        %v1517 = vsel %vm1204, %v1514, %v1516
        %v1518 = vrot.slane %v1460, 2
        %v1519 = vrot.slane %v1461, 2
        %v1520 = vsel %vm1204, %v1518, %v1519
        %v1521 = vrot.slane %v1462, 2
        %v1522 = vsel %vm1204, %v1519, %v1521
        %v1523 = vrot.slane %v1463, 2
        %v1524 = vrot.slane %v1464, 2
        %v1525 = vsel %vm1204, %v1523, %v1524
        %v1526 = vrot.slane %v1465, 2
        %v1527 = vsel %vm1204, %v1524, %v1526
        %v1528 = vrot.slane %v1466, 2
        %v1529 = vrot.slane %v1467, 2
        %v1530 = vsel %vm1204, %v1528, %v1529
        %v1531 = vrot.slane %v1468, 2
        %v1532 = vsel %vm1204, %v1529, %v1531
        %v1549 = vadd.f32 %v1424, %v1495
        %v1550 = vadd.f32 %v1425, %v1497
        %v1551 = vadd.f32 %v1426, %v1500
        %v1552 = vadd.f32 %v1427, %v1502
        %v1553 = vadd.f32 %v1428, %v1505
        %v1554 = vadd.f32 %v1429, %v1507
        %v1555 = vadd.f32 %v1430, %v1510
        %v1556 = vadd.f32 %v1431, %v1512
        %v1557 = vadd.f32 %v1432, %v1515
        %v1558 = vadd.f32 %v1433, %v1517
        %v1559 = vadd.f32 %v1434, %v1520
        %v1560 = vadd.f32 %v1435, %v1522
        %v1561 = vadd.f32 %v1436, %v1525
        %v1562 = vadd.f32 %v1437, %v1527
        %v1563 = vadd.f32 %v1438, %v1530
        %v1564 = vadd.f32 %v1439, %v1532
        %s1565 = scalar_lea.vmem [#allocation10], 8
        %v1566 = vld [vmem:[%s1565] sm:$0x1]
        %v1567 = vlaneseq
        %v1568 = vshrl.u32 %v1567, 7
        %v1569 = vsub.s32 0, %v1568
        %v1570 = vrot.slane %v1566, %v1569
        %v1571 = vmul.f32 %v964, %v1570
        %v1572 = vmul.f32 %v965, %v1570
        %v1573 = vmul.f32 %v967, %v1570
        %v1574 = vmul.f32 %v968, %v1570
        %v1575 = vmul.f32 %v970, %v1570
        %v1576 = vmul.f32 %v971, %v1570
        %v1577 = vmul.f32 %v973, %v1570
        %v1578 = vmul.f32 %v974, %v1570
        %v1579 = vmul.f32 %v976, %v1570
        %v1580 = vmul.f32 %v977, %v1570
        %v1581 = vmul.f32 %v979, %v1570
        %v1582 = vmul.f32 %v980, %v1570
        %v1583 = vmul.f32 %v982, %v1570
        %v1584 = vmul.f32 %v983, %v1570
        %v1585 = vmul.f32 %v985, %v1570
        %v1586 = vmul.f32 %v986, %v1570
        %v1587 = vadd.f32 %v1549, %v1571
        %v1588 = vadd.f32 %v1550, %v1572
        %v1589 = vadd.f32 %v1551, %v1573
        %v1590 = vadd.f32 %v1552, %v1574
        %v1591 = vadd.f32 %v1553, %v1575
        %v1592 = vadd.f32 %v1554, %v1576
        %v1593 = vadd.f32 %v1555, %v1577
        %v1594 = vadd.f32 %v1556, %v1578
        %v1595 = vadd.f32 %v1557, %v1579
        %v1596 = vadd.f32 %v1558, %v1580
        %v1597 = vadd.f32 %v1559, %v1581
        %v1598 = vadd.f32 %v1560, %v1582
        %v1599 = vadd.f32 %v1561, %v1583
        %v1600 = vadd.f32 %v1562, %v1584
        %v1601 = vadd.f32 %v1563, %v1585
        %v1602 = vadd.f32 %v1564, %v1586
        %v1603 = vld [vmem:[%s1565 + $0x1] sm:$0x1]
        %v1604 = vlaneseq
        %v1605 = vshrl.u32 %v1604, 7
        %v1606 = vsub.s32 0, %v1605
        %v1607 = vrot.slane %v1603, %v1606
        %v1608 = vmul.f32 %v964, %v1607
        %v1609 = vmul.f32 %v965, %v1607
        %v1610 = vmul.f32 %v966, %v1607
        %v1611 = vmul.f32 %v967, %v1607
        %v1612 = vmul.f32 %v968, %v1607
        %v1613 = vmul.f32 %v969, %v1607
        %v1614 = vmul.f32 %v970, %v1607
        %v1615 = vmul.f32 %v971, %v1607
        %v1616 = vmul.f32 %v972, %v1607
        %v1617 = vmul.f32 %v973, %v1607
        %v1618 = vmul.f32 %v974, %v1607
        %v1619 = vmul.f32 %v975, %v1607
        %v1620 = vmul.f32 %v976, %v1607
        %v1621 = vmul.f32 %v977, %v1607
        %v1622 = vmul.f32 %v978, %v1607
        %v1623 = vmul.f32 %v979, %v1607
        %v1624 = vmul.f32 %v980, %v1607
        %v1625 = vmul.f32 %v981, %v1607
        %v1626 = vmul.f32 %v982, %v1607
        %v1627 = vmul.f32 %v983, %v1607
        %v1628 = vmul.f32 %v984, %v1607
        %v1629 = vmul.f32 %v985, %v1607
        %v1630 = vmul.f32 %v986, %v1607
        %v1631 = vmul.f32 %v987, %v1607
        %v1656 = vrot.slane %v1608, 1
        %v1657 = vrot.slane %v1609, 1
        %v1658 = vsel %vm1078, %v1656, %v1657
        %v1659 = vrot.slane %v1610, 1
        %v1660 = vsel %vm1078, %v1657, %v1659
        %v1661 = vrot.slane %v1611, 1
        %v1662 = vrot.slane %v1612, 1
        %v1663 = vsel %vm1078, %v1661, %v1662
        %v1664 = vrot.slane %v1613, 1
        %v1665 = vsel %vm1078, %v1662, %v1664
        %v1666 = vrot.slane %v1614, 1
        %v1667 = vrot.slane %v1615, 1
        %v1668 = vsel %vm1078, %v1666, %v1667
        %v1669 = vrot.slane %v1616, 1
        %v1670 = vsel %vm1078, %v1667, %v1669
        %v1671 = vrot.slane %v1617, 1
        %v1672 = vrot.slane %v1618, 1
        %v1673 = vsel %vm1078, %v1671, %v1672
        %v1674 = vrot.slane %v1619, 1
        %v1675 = vsel %vm1078, %v1672, %v1674
        %v1676 = vrot.slane %v1620, 1
        %v1677 = vrot.slane %v1621, 1
        %v1678 = vsel %vm1078, %v1676, %v1677
        %v1679 = vrot.slane %v1622, 1
        %v1680 = vsel %vm1078, %v1677, %v1679
        %v1681 = vrot.slane %v1623, 1
        %v1682 = vrot.slane %v1624, 1
        %v1683 = vsel %vm1078, %v1681, %v1682
        %v1684 = vrot.slane %v1625, 1
        %v1685 = vsel %vm1078, %v1682, %v1684
        %v1686 = vrot.slane %v1626, 1
        %v1687 = vrot.slane %v1627, 1
        %v1688 = vsel %vm1078, %v1686, %v1687
        %v1689 = vrot.slane %v1628, 1
        %v1690 = vsel %vm1078, %v1687, %v1689
        %v1691 = vrot.slane %v1629, 1
        %v1692 = vrot.slane %v1630, 1
        %v1693 = vsel %vm1078, %v1691, %v1692
        %v1694 = vrot.slane %v1631, 1
        %v1695 = vsel %vm1078, %v1692, %v1694
        %v1712 = vadd.f32 %v1587, %v1658
        %v1713 = vadd.f32 %v1588, %v1660
        %v1714 = vadd.f32 %v1589, %v1663
        %v1715 = vadd.f32 %v1590, %v1665
        %v1716 = vadd.f32 %v1591, %v1668
        %v1717 = vadd.f32 %v1592, %v1670
        %v1718 = vadd.f32 %v1593, %v1673
        %v1719 = vadd.f32 %v1594, %v1675
        %v1720 = vadd.f32 %v1595, %v1678
        %v1721 = vadd.f32 %v1596, %v1680
        %v1722 = vadd.f32 %v1597, %v1683
        %v1723 = vadd.f32 %v1598, %v1685
        %v1724 = vadd.f32 %v1599, %v1688
        %v1725 = vadd.f32 %v1600, %v1690
        %v1726 = vadd.f32 %v1601, %v1693
        %v1727 = vadd.f32 %v1602, %v1695
        %v1728 = vld [vmem:[%s1565 + $0x2] sm:$0x1]
        %v1729 = vlaneseq
        %v1730 = vshrl.u32 %v1729, 7
        %v1731 = vsub.s32 0, %v1730
        %v1732 = vrot.slane %v1728, %v1731
        %v1733 = vmul.f32 %v964, %v1732
        %v1734 = vmul.f32 %v965, %v1732
        %v1735 = vmul.f32 %v966, %v1732
        %v1736 = vmul.f32 %v967, %v1732
        %v1737 = vmul.f32 %v968, %v1732
        %v1738 = vmul.f32 %v969, %v1732
        %v1739 = vmul.f32 %v970, %v1732
        %v1740 = vmul.f32 %v971, %v1732
        %v1741 = vmul.f32 %v972, %v1732
        %v1742 = vmul.f32 %v973, %v1732
        %v1743 = vmul.f32 %v974, %v1732
        %v1744 = vmul.f32 %v975, %v1732
        %v1745 = vmul.f32 %v976, %v1732
        %v1746 = vmul.f32 %v977, %v1732
        %v1747 = vmul.f32 %v978, %v1732
        %v1748 = vmul.f32 %v979, %v1732
        %v1749 = vmul.f32 %v980, %v1732
        %v1750 = vmul.f32 %v981, %v1732
        %v1751 = vmul.f32 %v982, %v1732
        %v1752 = vmul.f32 %v983, %v1732
        %v1753 = vmul.f32 %v984, %v1732
        %v1754 = vmul.f32 %v985, %v1732
        %v1755 = vmul.f32 %v986, %v1732
        %v1756 = vmul.f32 %v987, %v1732
        %v1781 = vrot.slane %v1733, 2
        %v1782 = vrot.slane %v1734, 2
        %v1783 = vsel %vm1204, %v1781, %v1782
        %v1784 = vrot.slane %v1735, 2
        %v1785 = vsel %vm1204, %v1782, %v1784
        %v1786 = vrot.slane %v1736, 2
        %v1787 = vrot.slane %v1737, 2
        %v1788 = vsel %vm1204, %v1786, %v1787
        %v1789 = vrot.slane %v1738, 2
        %v1790 = vsel %vm1204, %v1787, %v1789
        %v1791 = vrot.slane %v1739, 2
        %v1792 = vrot.slane %v1740, 2
        %v1793 = vsel %vm1204, %v1791, %v1792
        %v1794 = vrot.slane %v1741, 2
        %v1795 = vsel %vm1204, %v1792, %v1794
        %v1796 = vrot.slane %v1742, 2
        %v1797 = vrot.slane %v1743, 2
        %v1798 = vsel %vm1204, %v1796, %v1797
        %v1799 = vrot.slane %v1744, 2
        %v1800 = vsel %vm1204, %v1797, %v1799
        %v1801 = vrot.slane %v1745, 2
        %v1802 = vrot.slane %v1746, 2
        %v1803 = vsel %vm1204, %v1801, %v1802
        %v1804 = vrot.slane %v1747, 2
        %v1805 = vsel %vm1204, %v1802, %v1804
        %v1806 = vrot.slane %v1748, 2
        %v1807 = vrot.slane %v1749, 2
        %v1808 = vsel %vm1204, %v1806, %v1807
        %v1809 = vrot.slane %v1750, 2
        %v1810 = vsel %vm1204, %v1807, %v1809
        %v1811 = vrot.slane %v1751, 2
        %v1812 = vrot.slane %v1752, 2
        %v1813 = vsel %vm1204, %v1811, %v1812
        %v1814 = vrot.slane %v1753, 2
        %v1815 = vsel %vm1204, %v1812, %v1814
        %v1816 = vrot.slane %v1754, 2
        %v1817 = vrot.slane %v1755, 2
        %v1818 = vsel %vm1204, %v1816, %v1817
        %v1819 = vrot.slane %v1756, 2
        %v1820 = vsel %vm1204, %v1817, %v1819
        %v1837 = vadd.f32 %v1712, %v1783
        %v1838 = vadd.f32 %v1713, %v1785
        %v1839 = vadd.f32 %v1714, %v1788
        %v1840 = vadd.f32 %v1715, %v1790
        %v1841 = vadd.f32 %v1716, %v1793
        %v1842 = vadd.f32 %v1717, %v1795
        %v1843 = vadd.f32 %v1718, %v1798
        %v1844 = vadd.f32 %v1719, %v1800
        %v1845 = vadd.f32 %v1720, %v1803
        %v1846 = vadd.f32 %v1721, %v1805
        %v1847 = vadd.f32 %v1722, %v1808
        %v1848 = vadd.f32 %v1723, %v1810
        %v1849 = vadd.f32 %v1724, %v1813
        %v1850 = vadd.f32 %v1725, %v1815
        %v1851 = vadd.f32 %v1726, %v1818
        %v1852 = vadd.f32 %v1727, %v1820
        %v1853 = vld [vmem:[#allocation11] sm:$0x1]
        %v1855 = vlaneseq
        %v1856 = vshrl.u32 %v1855, 7
        %v1857 = vsub.s32 0, %v1856
        %v1858 = vrot.slane %v1853, %v1857
        %v1860 = vadd.f32 %v1837, %v1858
        %v1861 = vadd.f32 %v1838, %v1858
        %v1862 = vadd.f32 %v1839, %v1858
        %v1863 = vadd.f32 %v1840, %v1858
        %v1864 = vadd.f32 %v1841, %v1858
        %v1865 = vadd.f32 %v1842, %v1858
        %v1866 = vadd.f32 %v1843, %v1858
        %v1867 = vadd.f32 %v1844, %v1858
        %v1868 = vadd.f32 %v1845, %v1858
        %v1869 = vadd.f32 %v1846, %v1858
        %v1870 = vadd.f32 %v1847, %v1858
        %v1871 = vadd.f32 %v1848, %v1858
        %v1872 = vadd.f32 %v1849, %v1858
        %v1873 = vadd.f32 %v1850, %v1858
        %v1874 = vadd.f32 %v1851, %v1858
        %v1875 = vadd.f32 %v1852, %v1858
        %v1876 = vmax.f32 %v1860, 0.0
        %v1877 = vmax.f32 %v1861, 0.0
        %v1878 = vmax.f32 %v1862, 0.0
        %v1879 = vmax.f32 %v1863, 0.0
        %v1880 = vmax.f32 %v1864, 0.0
        %v1881 = vmax.f32 %v1865, 0.0
        %v1882 = vmax.f32 %v1866, 0.0
        %v1883 = vmax.f32 %v1867, 0.0
        %v1884 = vmax.f32 %v1868, 0.0
        %v1885 = vmax.f32 %v1869, 0.0
        %v1886 = vmax.f32 %v1870, 0.0
        %v1887 = vmax.f32 %v1871, 0.0
        %v1888 = vmax.f32 %v1872, 0.0
        %v1889 = vmax.f32 %v1873, 0.0
        %v1890 = vmax.f32 %v1874, 0.0
        %v1891 = vmax.f32 %v1875, 0.0
        %v1892 = vmin.f32 %v1876, 6.0
        %v1893 = vmin.f32 %v1877, 6.0
        %v1894 = vmin.f32 %v1878, 6.0
        %v1895 = vmin.f32 %v1879, 6.0
        %v1896 = vmin.f32 %v1880, 6.0
        %v1897 = vmin.f32 %v1881, 6.0
        %v1898 = vmin.f32 %v1882, 6.0
        %v1899 = vmin.f32 %v1883, 6.0
        %v1900 = vmin.f32 %v1884, 6.0
        %v1901 = vmin.f32 %v1885, 6.0
        %v1902 = vmin.f32 %v1886, 6.0
        %v1903 = vmin.f32 %v1887, 6.0
        %v1904 = vmin.f32 %v1888, 6.0
        %v1905 = vmin.f32 %v1889, 6.0
        %v1906 = vmin.f32 %v1890, 6.0
        %v1907 = vmin.f32 %v1891, 6.0
        %v1908 = vpack.c.bf16 %v1893, %v1892
        %v1909 = vpack.c.bf16 %v1895, %v1894
        %v1910 = vpack.c.bf16 %v1897, %v1896
        %v1911 = vpack.c.bf16 %v1899, %v1898
        %v1912 = vpack.c.bf16 %v1901, %v1900
        %v1913 = vpack.c.bf16 %v1903, %v1902
        %v1914 = vpack.c.bf16 %v1905, %v1904
        %v1915 = vpack.c.bf16 %v1907, %v1906
        %v1916 = vld [vmem:[#allocation13] sm:$0xf]
        %v1917 = vld [vmem:[#allocation13 + $0x4] sm:$0xf]
        %v1918 = vld [vmem:[#allocation13 + $0x8] sm:$0xf]
        %v1919 = vld [vmem:[#allocation14] sm:$0x1]
        %v1921 = vlaneseq
        %v1922 = vshrl.u32 %v1921, 7
        %v1923 = vsub.s32 0, %v1922
        %v1924 = vrot.slane %v1919, %v1923
        %v1929 = vunpack.c.l.b16 %v1916
        %v1930 = vunpack.c.l.b16 %v1917
        %v1931 = vunpack.c.l.b16 %v1918
        %v1932 = vpack.c.b16 %v1930, %v1929
        %v1933 = vpack.c.b16 %v1931, %v1931
        %vm1935 = vcmask 195584
        %v1937 = vsel %vm1935, %v1908, 0
        %v1940 = vsel %vm1935, %v1909, 0
        %v1943 = vsel %vm1935, %v1910, 0
        %v1946 = vsel %vm1935, %v1911, 0
        %v1949 = vsel %vm1935, %v1912, 0
        %v1952 = vsel %vm1935, %v1913, 0
        %v1955 = vsel %vm1935, %v1914, 0
        %v1958 = vsel %vm1935, %v1915, 0
        %vm1960 = vcmask 1043456
        %v1962 = vsel %vm1960, %v1933, 0
        %1964 = vmatprep.subr.bf16.mxu0 0
        %1965 = vmatpush1.bf16.msra.mxu0 %v1932
        %1966 = vmatprep.subr.bf16.mxu0 0
        %1967 = vmatpush1.bf16.msra.mxu0 %v1962
        %1968 = vmatprep.subr.bf16.mxu0 0
        %1969 = vmatpush1.bf16.msra.mxu0 0
        %1970 = vmatprep.subr.bf16.mxu0 0
        %1971 = vmatpush1.bf16.msra.mxu0 0
        %1972 = vmatprep.subr.bf16.mxu0 0
        %1973 = vmatpush1.bf16.msra.mxu0 0
        %1974 = vmatprep.subr.bf16.mxu0 0
        %1975 = vmatpush1.bf16.msra.mxu0 0
        %1976 = vmatprep.subr.bf16.mxu0 0
        %1977 = vmatpush1.bf16.msra.mxu0 0
        %1978 = vmatprep.subr.bf16.mxu0 0
        %1979 = vmatpush1.bf16.msra.mxu0 0
        %1980 = vmatprep.subr.bf16.mxu0 0
        %1981 = vmatpush1.bf16.msra.mxu0 0
        %1982 = vmatprep.subr.bf16.mxu0 0
        %1983 = vmatpush1.bf16.msra.mxu0 0
        %1984 = vmatprep.subr.bf16.mxu0 0
        %1985 = vmatpush1.bf16.msra.mxu0 0
        %1986 = vmatprep.subr.bf16.mxu0 0
        %1987 = vmatpush1.bf16.msra.mxu0 0
        %1988 = vmatprep.subr.bf16.mxu0 0
        %1989 = vmatpush1.bf16.msra.mxu0 0
        %1990 = vmatprep.subr.bf16.mxu0 0
        %1991 = vmatpush1.bf16.msra.mxu0 0
        %1992 = vmatprep.subr.bf16.mxu0 0
        %1993 = vmatpush1.bf16.msra.mxu0 0
        %1994 = vmatprep.subr.bf16.mxu0 0
        %1995 = vmatpush1.bf16.msra.mxu0 0
        %1996 = vmatprep.mubr.bf16.mxu0 0
        %1997 = vmatmul.mubr.bf16.gmra.mrb[0].mxu0 %v1937
        %v1998 = vpop.f32.mrb[0].mxu0
        %v1999 = vadd.f32 %v1924, %v1998
        %v2000 = vpop.f32.mrb[0].mxu0
        %v2001 = vpop.f32.mrb[0].mxu0
        %v2002 = vadd.f32 %v1924, %v2001
        %v2003 = vpop.f32.mrb[0].mxu0
        %2004 = vmatprep.mubr.bf16.mxu0 0
        %2005 = vmatmul.mubr.bf16.gmra.mrb[0].mxu0 %v1940
        %v2006 = vpop.f32.mrb[0].mxu0
        %v2007 = vadd.f32 %v1924, %v2006
        %v2008 = vpop.f32.mrb[0].mxu0
        %v2009 = vpop.f32.mrb[0].mxu0
        %v2010 = vadd.f32 %v1924, %v2009
        %v2011 = vpop.f32.mrb[0].mxu0
        %2012 = vmatprep.mubr.bf16.mxu0 0
        %2013 = vmatmul.mubr.bf16.gmra.mrb[0].mxu0 %v1943
        %v2014 = vpop.f32.mrb[0].mxu0
        %v2015 = vadd.f32 %v1924, %v2014
        %v2016 = vpop.f32.mrb[0].mxu0
        %v2017 = vpop.f32.mrb[0].mxu0
        %v2018 = vadd.f32 %v1924, %v2017
        %v2019 = vpop.f32.mrb[0].mxu0
        %2020 = vmatprep.mubr.bf16.mxu0 0
        %2021 = vmatmul.mubr.bf16.gmra.mrb[0].mxu0 %v1946
        %v2022 = vpop.f32.mrb[0].mxu0
        %v2023 = vadd.f32 %v1924, %v2022
        %v2024 = vpop.f32.mrb[0].mxu0
        %v2025 = vpop.f32.mrb[0].mxu0
        %v2026 = vadd.f32 %v1924, %v2025
        %v2027 = vpop.f32.mrb[0].mxu0
        %2028 = vmatprep.mubr.bf16.mxu0 0
        %2029 = vmatmul.mubr.bf16.gmra.mrb[0].mxu0 %v1949
        %v2030 = vpop.f32.mrb[0].mxu0
        %v2031 = vadd.f32 %v1924, %v2030
        %v2032 = vpop.f32.mrb[0].mxu0
        %v2033 = vpop.f32.mrb[0].mxu0
        %v2034 = vadd.f32 %v1924, %v2033
        %v2035 = vpop.f32.mrb[0].mxu0
        %2036 = vmatprep.mubr.bf16.mxu0 0
        %2037 = vmatmul.mubr.bf16.gmra.mrb[0].mxu0 %v1952
        %v2038 = vpop.f32.mrb[0].mxu0
        %v2039 = vadd.f32 %v1924, %v2038
        %v2040 = vpop.f32.mrb[0].mxu0
        %v2041 = vpop.f32.mrb[0].mxu0
        %v2042 = vadd.f32 %v1924, %v2041
        %v2043 = vpop.f32.mrb[0].mxu0
        %2044 = vmatprep.mubr.bf16.mxu0 0
        %2045 = vmatmul.mubr.bf16.gmra.mrb[0].mxu0 %v1955
        %v2046 = vpop.f32.mrb[0].mxu0
        %v2047 = vadd.f32 %v1924, %v2046
        %v2048 = vpop.f32.mrb[0].mxu0
        %v2049 = vpop.f32.mrb[0].mxu0
        %v2050 = vadd.f32 %v1924, %v2049
        %v2051 = vpop.f32.mrb[0].mxu0
        %2052 = vmatprep.mubr.bf16.mxu0 0
        %2053 = vmatmul.mubr.bf16.gmra.mrb[0].mxu0 %v1958
        %v2054 = vpop.f32.mrb[0].mxu0
        %v2055 = vadd.f32 %v1924, %v2054
        %v2056 = vpop.f32.mrb[0].mxu0
        %v2057 = vpop.f32.mrb[0].mxu0
        %v2058 = vadd.f32 %v1924, %v2057
        %v2059 = vpop.f32.mrb[0].mxu0
        %2060 = vdwg.mxu0
        %v2085 = vrot.slane %v465, 1
        %v2086 = vrot.slane %v466, 1
        %v2087 = vsel %vm1078, %v2085, %v2086
        %v2088 = vrot.slane %v467, 1
        %v2089 = vsel %vm1078, %v2086, %v2088
        %v2090 = vrot.slane %v468, 1
        %v2091 = vrot.slane %v469, 1
        %v2092 = vsel %vm1078, %v2090, %v2091
        %v2093 = vrot.slane %v470, 1
        %v2094 = vsel %vm1078, %v2091, %v2093
        %v2095 = vrot.slane %v471, 1
        %v2096 = vrot.slane %v472, 1
        %v2097 = vsel %vm1078, %v2095, %v2096
        %v2098 = vrot.slane %v473, 1
        %v2099 = vsel %vm1078, %v2096, %v2098
        %v2100 = vrot.slane %v474, 1
        %v2101 = vrot.slane %v475, 1
        %v2102 = vsel %vm1078, %v2100, %v2101
        %v2103 = vrot.slane %v476, 1
        %v2104 = vsel %vm1078, %v2101, %v2103
        %v2105 = vrot.slane %v477, 1
        %v2106 = vrot.slane %v478, 1
        %v2107 = vsel %vm1078, %v2105, %v2106
        %v2108 = vrot.slane %v479, 1
        %v2109 = vsel %vm1078, %v2106, %v2108
        %v2110 = vrot.slane %v480, 1
        %v2111 = vrot.slane %v481, 1
        %v2112 = vsel %vm1078, %v2110, %v2111
        %v2113 = vrot.slane %v482, 1
        %v2114 = vsel %vm1078, %v2111, %v2113
        %v2115 = vrot.slane %v483, 1
        %v2116 = vrot.slane %v484, 1
        %v2117 = vsel %vm1078, %v2115, %v2116
        %v2118 = vrot.slane %v485, 1
        %v2119 = vsel %vm1078, %v2116, %v2118
        %v2120 = vrot.slane %v486, 1
        %v2121 = vrot.slane %v487, 1
        %v2122 = vsel %vm1078, %v2120, %v2121
        %v2123 = vrot.slane %v488, 1
        %v2124 = vsel %vm1078, %v2121, %v2123
        %v2141 = vadd.f32 %v1999, %v2087
        %v2142 = vadd.f32 %v2002, %v2089
        %v2143 = vadd.f32 %v2007, %v2092
        %v2144 = vadd.f32 %v2010, %v2094
        %v2145 = vadd.f32 %v2015, %v2097
        %v2146 = vadd.f32 %v2018, %v2099
        %v2147 = vadd.f32 %v2023, %v2102
        %v2148 = vadd.f32 %v2026, %v2104
        %v2149 = vadd.f32 %v2031, %v2107
        %v2150 = vadd.f32 %v2034, %v2109
        %v2151 = vadd.f32 %v2039, %v2112
        %v2152 = vadd.f32 %v2042, %v2114
        %v2153 = vadd.f32 %v2047, %v2117
        %v2154 = vadd.f32 %v2050, %v2119
        %v2155 = vadd.f32 %v2055, %v2122
        %v2156 = vadd.f32 %v2058, %v2124
        %2157 = vst.msk [vmem:[%s460] sm:$0xff] %vm515, %v2141
        %2158 = vst.msk [vmem:[%s460 + $0x8] sm:$0xff] %vm515, %v2142
        %2159 = vst.msk [vmem:[%s460 + $0x10] sm:$0xff] %vm515, %v2143
        %2160 = vst.msk [vmem:[%s460 + $0x18] sm:$0xff] %vm515, %v2144
        %2161 = vst.msk [vmem:[%s460 + $0x20] sm:$0xff] %vm515, %v2145
        %2162 = vst.msk [vmem:[%s460 + $0x28] sm:$0xff] %vm515, %v2146
        %2163 = vst.msk [vmem:[%s460 + $0x30] sm:$0xff] %vm515, %v2147
        %2164 = vst.msk [vmem:[%s460 + $0x38] sm:$0xff] %vm515, %v2148
        %2165 = vst.msk [vmem:[%s460 + $0x40] sm:$0xff] %vm515, %v2149
        %2166 = vst.msk [vmem:[%s460 + $0x48] sm:$0xff] %vm515, %v2150
        %2167 = vst.msk [vmem:[%s460 + $0x50] sm:$0xff] %vm515, %v2151
        %2168 = vst.msk [vmem:[%s460 + $0x58] sm:$0xff] %vm515, %v2152
        %2169 = vst.msk [vmem:[%s460 + $0x60] sm:$0xff] %vm515, %v2153
        %2170 = vst.msk [vmem:[%s460 + $0x68] sm:$0xff] %vm515, %v2154
        %2171 = vst.msk [vmem:[%s460 + $0x70] sm:$0xff] %vm515, %v2155
        %2172 = vst.msk [vmem:[%s460 + $0x78] sm:$0xff] %vm515, %v2156
        %s2173 = sand.u32 %s233, 1
        %s2174 = scalar_lea.sflag [#allocation4], %s2173
        %s2175 = sand.u32 %s233, 1
        %s2176 = smul.addr %s2175, 128
        %s2177 = scalar_lea.vmem [#allocation16], %s2176
        // Predicated region
        $region85: #{tpu_custom_call.1} parent=51 // pred_check
          %p2178 = pneg %p243
        $region86: #{tpu_custom_call.1} parent=51 // pred_check_branch
          %2180 = sbr.rel (%p2178) target = $region88
        $region87: #{tpu_custom_call.1} parent=51 // pred_region
          %s2182 = ssub.s32 2048, 2048
          %2183 = vsyncadd %s2174, %s2182
          %s2184 = smul.addr %s36, 16
          %s2185 = smul.addr %s35, 32
          %s2186 = sadd.s32 %s2184, %s2185
          %s2187 = smul.addr %s2186, 128
          %s2188 = scalar_lea.hbm %s8, %s2187
          %s2189 = sshll.u32 %s2177, 4
          %s2190 = int_to_ptr.vmem [resolvable:$true] %s2189
          %2195 = dma.vmem_to_hbm [thread:$0]  %s2190, 2048, %s2188, %s2174, 128, 128, 8
        $region88: #{tpu_custom_call.1} parent=51 // pred_fallthru
          _
      $region52: #{tpu_custom_call.1} parent=5 // pred_fallthru
        _
      %p2196 = scmp.le.s32.totalorder 2, %s26
      // Predicated region
      $region89: #{tpu_custom_call.1} parent=5 // pred_check
        %p2197 = pneg %p2196
      $region90: #{tpu_custom_call.1} parent=5 // pred_check_branch
        %2199 = sbr.rel (%p2197) target = $region92
      $region91: #{tpu_custom_call.1} parent=5 // pred_region
        %s2200 = ssub.s32 %s26, 2
        // Predicated region
        $region93: #{tpu_custom_call.1} parent=91 // pred_check
          %p2201 = pneg %p249
        $region94: #{tpu_custom_call.1} parent=91 // pred_check_branch
          %2203 = sbr.rel (%p2201) target = $region96
        $region95: #{tpu_custom_call.1} parent=91 // pred_region
          %s2204 = sand.u32 %s234, 1
          %s2205 = scalar_lea.sflag [#allocation4], %s2204
          %s2206 = sand.u32 %s234, 1
          %s2207 = smul.addr %s2206, 128
          %s2208 = scalar_lea.vmem [#allocation16], %s2207
          %2209 = dma.done %s2205, 2048
        $region96: #{tpu_custom_call.1} parent=91 // pred_fallthru
          _
      $region92: #{tpu_custom_call.1} parent=5 // pred_fallthru
        _
    $region6: #{tpu_custom_call.1} parent=1 // loop_footer
      %s30 = sadd.s32 1, %s26
    $region7: #{tpu_custom_call.1} parent=1 // loop_footer_branch
      %25 = sbr.rel target = $region3
    $region8: #{tpu_custom_call.1} parent=1 // loop_exit
      _
    %2210 = vsyncpa [#allocation3], 1
    %s2211 = scalar_lea.sflag [#allocation3], 1
    %2212 = vsyncpa %s2211, 1
    %2213 = vsyncpa [#allocation6], 1
    %s2214 = scalar_lea.sflag [#allocation6], 1
    %2215 = vsyncpa %s2214, 1
    %2216 = vsyncpa [#allocation9], 1
    %2217 = vsyncpa [#allocation12], 1
    %2218 = vsyncpa [#allocation15], 1
    %2219 = vsyncpa [#allocation4], 1
    %s2220 = scalar_lea.sflag [#allocation4], 1
    %2221 = vsyncpa %s2220, 1

</llo_original>
